<compile_context>
chip_gen: v7x
topology: tpu7x:2x2x1
jax: 0.10.0
libtpu: 0.0.40
codegen_flags: <defaults>
</compile_context>

<pallas_src>
import functools
import math

import jax
import jax.numpy as jnp
import numpy as np
from jax.experimental import pallas as pl
from jax.experimental.pallas import tpu as pltpu

# ----------------------------- configuration --------------------------------
C, H, W = 4, 16, 16         # image (NCHW)
IN_DIM = C * H * W          # flattened image features (1024)
ENC_HIDDEN = 64             # synthetic frozen-encoder hidden width
LATENT_DIM = 8              # config['latent_dim']
HIDDEN_DIM = 32             # config['hidden_dim']
EMBED_DIM = 16              # config['embedding_dim']
HALF = EMBED_DIM // 2

# sinusoidal tables: trace-time constants (no iota / exp in the kernel);
# duplicated freqs + [0, pi/2] phase -> single sin, no lane concat.
_FREQS = np.exp(-(math.log(10000.0) / (HALF - 1))
                * np.arange(HALF, dtype=np.float32))
_FREQS2 = np.concatenate([_FREQS, _FREQS]).reshape(1, EMBED_DIM)
_PHASE = np.concatenate([np.zeros(HALF, np.float32),
                         np.full(HALF, np.pi / 2, np.float32)]).reshape(1, EMBED_DIM)


# ------------------------------- kernel -------------------------------------
def ldm_kernel(
    x_ref, t_ref, freqs2_ref, phase_ref,
    we1_ref, be1_ref,            # frozen encoder: flatten -> Linear -> ReLU
    wt1_ref, bt1_ref,            # t_net hidden Linear
    wmean_ref, wt2_ref, bz_ref,  # z_t = h@wmean + th@wt2 + (bmean+bt2)
    w1z_ref, w1t_ref, b1_ref,    # noise predictor Linear(L+1, H): z part / t part
    w2_ref, b2_ref,              # Linear(H, H)
    w3_ref, b3_ref,              # Linear(H, L)
    out_ref,
):
    f32 = jnp.float32
    t = t_ref[...].astype(f32)                                        # (BM, 1)

    # ---- frozen encoder hidden: per-tile bf16 cast of x, f32 accumulate ----
    x = x_ref[...].astype(jnp.bfloat16)
    h = jnp.dot(x, we1_ref[...], preferred_element_type=f32) + be1_ref[...]
    h = jnp.maximum(h, 0.0)                                           # (BM, ENC_HIDDEN)

    # ---- SinusoidalPositionalEmbedding: sin(t*[f,f] + [0,pi/2]) == [sin, cos] ----
    t_embed = jnp.sin(t * freqs2_ref[...] + phase_ref[...])           # (BM, EMBED_DIM)

    # ---- t_net hidden (EmbeddingMLP first layer + ReLU) ----
    th = jnp.dot(t_embed, wt1_ref[...], preferred_element_type=f32) + bt1_ref[...]
    th = jnp.maximum(th, 0.0)                                         # (BM, EMBED_DIM)

    # ---- z_t = mean + t_out (two dots; un-fused, no lane concat) ----
    z_t = (jnp.dot(h, wmean_ref[...], preferred_element_type=f32)
           + jnp.dot(th, wt2_ref[...], preferred_element_type=f32)
           + bz_ref[...])                                             # (BM, LATENT_DIM)

    # ---- noise predictor: Linear(L+1,H) -> ReLU -> Linear(H,H) -> ReLU -> Linear(H,L)
    # The K=1 time column rides the VPU (broadcast multiply), not the MXU.
    h1 = (jnp.dot(z_t, w1z_ref[...], preferred_element_type=f32)
          + t * w1t_ref[...] + b1_ref[...])
    h1 = jnp.maximum(h1, 0.0)
    h2 = jnp.dot(h1, w2_ref[...], preferred_element_type=f32) + b2_ref[...]
    h2 = jnp.maximum(h2, 0.0)
    out = jnp.dot(h2, w3_ref[...], preferred_element_type=f32) + b3_ref[...]
    out_ref[...] = out.astype(out_ref.dtype)


# --------------------------- batch-tile heuristic ----------------------------
def _default_bm(b: int) -> int:
    """Per-generation batch tile: 1 grid step on single-TC v5e/v6e at modest
    batch, >=2 'parallel' steps so v7x's two TensorCores both get work."""
    kind = jax.devices()[0].device_kind.lower()
    n_tc = 2 if "v7" in kind else 1
    if n_tc == 1 and b <= 512:
        return b                              # one step; block == full array
    steps = max(n_tc, 2)                      # megacore on v7x / DMA overlap
    bm = min(1024, pl.cdiv(b, steps))
    bm = ((bm + 15) // 16) * 16               # bf16 sublane packing (32 if int8/fp8)
    return max(16, min(bm, b))


# ------------------------------- wrapper -------------------------------------
@functools.partial(jax.jit, static_argnames=("bm",))
def ldm_forward(x_nchw, t_norm, params, *, bm=None):
    """x_nchw: (B, C, H, W); t_norm: (B, 1) or (B,) -> noise_pred (B, LATENT_DIM) f32."""
    b = x_nchw.shape[0]
    (we1, be1, wt1, bt1, wmean, wt2, bz, w1z, w1t, b1, w2, b2, w3, b3) = params

    # trace-time glue only: flatten NCHW row-major, keep producer dtype
    # (bf16 cast happens per-tile inside the kernel).
    x_flat = x_nchw.reshape(b, -1)
    t_norm = t_norm.reshape(b, 1).astype(jnp.float32)
    freqs2 = jnp.asarray(_FREQS2)
    phase = jnp.asarray(_PHASE)

    if bm is None:
        bm = _default_bm(b)
    bm = min(bm, b)
    grid_b = pl.cdiv(b, bm)
    # No padding for ragged batches: Pallas masks the edge block; garbage rows
    # in a partial tile are never written back (out_shape is exactly (b, L)).

    batch_map = lambda i: (i, 0)

    def resident(arr):
        # full-array block, constant index -> DMA'd once, stays VMEM-resident
        return pl.BlockSpec(arr.shape, lambda i: (0, 0))

    in_specs = [
        pl.BlockSpec((bm, IN_DIM), batch_map),        # x
        pl.BlockSpec((bm, 1), batch_map),             # t_norm
        resident(freqs2), resident(phase),
        resident(we1), resident(be1),
        resident(wt1), resident(bt1),
        resident(wmean), resident(wt2), resident(bz),
        resident(w1z), resident(w1t), resident(b1),
        resident(w2), resident(b2),
        resident(w3), resident(b3),
    ]

    # advisory cost hint so XLA can overlap this tiny custom call
    flops = 2 * b * (IN_DIM * ENC_HIDDEN
                     + EMBED_DIM * EMBED_DIM
                     + ENC_HIDDEN * LATENT_DIM + EMBED_DIM * LATENT_DIM
                     + LATENT_DIM * HIDDEN_DIM + HIDDEN_DIM * HIDDEN_DIM
                     + HIDDEN_DIM * LATENT_DIM)
    weight_bytes = sum(int(np.prod(p.shape)) * p.dtype.itemsize for p in params)
    bytes_accessed = (b * IN_DIM * x_flat.dtype.itemsize + b * 4
                      + weight_bytes + b * LATENT_DIM * 4)
    cost = pl.CostEstimate(flops=flops, transcendentals=b * EMBED_DIM,
                           bytes_accessed=bytes_accessed)

    return pl.pallas_call(
        ldm_kernel,
        grid=(grid_b,),
        in_specs=in_specs,
        out_specs=pl.BlockSpec((bm, LATENT_DIM), batch_map),
        out_shape=jax.ShapeDtypeStruct((b, LATENT_DIM), jnp.float32),
        compiler_params=pltpu.CompilerParams(
            dimension_semantics=("parallel",)),
        cost_estimate=cost,
    )(x_flat, t_norm, freqs2, phase,
      we1, be1, wt1, bt1, wmean, wt2, bz, w1z, w1t, b1, w2, b2, w3, b3)


# --------------------------- parameter creation ------------------------------
def _linear_params(key, fan_in, fan_out):
    """PyTorch-style U(-1/sqrt(fan_in), 1/sqrt(fan_in)); weight stored [in, out]."""
    kw, kb = jax.random.split(key)
    bound = 1.0 / math.sqrt(fan_in)
    w = jax.random.uniform(kw, (fan_in, fan_out), jnp.float32, -bound, bound)
    b = jax.random.uniform(kb, (1, fan_out), jnp.float32, -bound, bound)
    return w, b


def make_params(key):
    keys = jax.random.split(key, 7)
    # frozen autoencoder encoder (logvar head dropped: dead in LDM.forward)
    # TODO(synk): the reference never defines the autoencoder; a flatten ->
    # Linear -> ReLU -> Linear(mean) encoder is synthesized here.
    we1, be1 = _linear_params(keys[0], IN_DIM, ENC_HIDDEN)
    wmean, bmean = _linear_params(keys[1], ENC_HIDDEN, LATENT_DIM)
    # t_net (EmbeddingMLP: Linear -> ReLU -> Linear)
    wt1, bt1 = _linear_params(keys[2], EMBED_DIM, EMBED_DIM)
    wt2, bt2 = _linear_params(keys[3], EMBED_DIM, LATENT_DIM)
    # noise predictor Sequential
    w1, b1 = _linear_params(keys[4], LATENT_DIM + 1, HIDDEN_DIM)
    w2, b2 = _linear_params(keys[5], HIDDEN_DIM, HIDDEN_DIM)
    w3, b3 = _linear_params(keys[6], HIDDEN_DIM, LATENT_DIM)

    # --- one-time kernel-dtype / layout prep, hoisted out of the call path ---
    we1 = we1.astype(jnp.bfloat16)        # frozen encoder weight in kernel dtype
    bz = bmean + bt2                      # fused bias of z_t = mean + t_out
    # TODO(synk): NoisePredictor declares Linear(latent_dim+1, hidden) while
    # z_t has latent_dim features; we honor the declared shape by feeding
    # [z_t, t_norm] in split-weight form (t column handled on the VPU).
    w1z = w1[:LATENT_DIM, :]              # (L, HIDDEN_DIM)
    w1t = w1[LATENT_DIM:, :]              # (1, HIDDEN_DIM)
    return (we1, be1, wt1, bt1, wmean, wt2, bz, w1z, w1t, b1, w2, b2, w3, b3)


# ----------------------------- pure-JAX reference ----------------------------
def ldm_reference(x_nchw, t_norm, params):
    (we1, be1, wt1, bt1, wmean, wt2, bz, w1z, w1t, b1, w2, b2, w3, b3) = params
    b = x_nchw.shape[0]
    f32 = jnp.float32
    x = x_nchw.reshape(b, -1).astype(jnp.bfloat16)
    t = t_norm.reshape(b, 1).astype(f32)
    h = jnp.maximum(jnp.dot(x, we1, preferred_element_type=f32) + be1, 0.0)
    ang = t * jnp.asarray(_FREQS)[None, :]
    t_embed = jnp.concatenate([jnp.sin(ang), jnp.cos(ang)], axis=-1)
    th = jnp.maximum(jnp.dot(t_embed, wt1, preferred_element_type=f32) + bt1, 0.0)
    z_t = (jnp.dot(h, wmean, preferred_element_type=f32)
           + jnp.dot(th, wt2, preferred_element_type=f32) + bz)
    h1 = jnp.maximum(jnp.dot(z_t, w1z, preferred_element_type=f32)
                     + t * w1t + b1, 0.0)
    h2 = jnp.maximum(jnp.dot(h1, w2, preferred_element_type=f32) + b2, 0.0)
    return jnp.dot(h2, w3, preferred_element_type=f32) + b3


# --------------------------------- main --------------------------------------
if __name__ == "__main__":
    root = jax.random.PRNGKey(0)
    k_param, k_x, k_t = jax.random.split(root, 3)

    BATCH = 2
    params = make_params(k_param)
    # upstream hands us f32; the kernel does the per-tile bf16 cast itself.
    x = jax.random.normal(k_x, (BATCH, C, H, W), jnp.float32)
    t_norm = jax.random.uniform(k_t, (BATCH, 1), jnp.float32)   # normalized timestep

    noise_pred = ldm_forward(x, t_norm, params)
    jax.block_until_ready(noise_pred)

    assert noise_pred.shape == (BATCH, LATENT_DIM)
    assert noise_pred.dtype == jnp.float32

    ref = ldm_reference(x, t_norm, params)
    np.testing.assert_allclose(np.asarray(noise_pred), np.asarray(ref),
                               rtol=2e-2, atol=2e-2)
    print("KERNEL_OK")
</pallas_src>

<mosaic_0001>
module attributes {stable_mosaic.version = 11 : i64} {
  func.func @ldm_kernel(%arg0: i32, %arg1: memref<2x1024xf32, #tpu.memory_space<vmem>>, %arg2: memref<2x1xf32, #tpu.memory_space<vmem>>, %arg3: memref<1x16xf32, #tpu.memory_space<vmem>>, %arg4: memref<1x16xf32, #tpu.memory_space<vmem>>, %arg5: memref<1024x64xbf16, #tpu.memory_space<vmem>>, %arg6: memref<1x64xf32, #tpu.memory_space<vmem>>, %arg7: memref<16x16xf32, #tpu.memory_space<vmem>>, %arg8: memref<1x16xf32, #tpu.memory_space<vmem>>, %arg9: memref<64x8xf32, #tpu.memory_space<vmem>>, %arg10: memref<16x8xf32, #tpu.memory_space<vmem>>, %arg11: memref<1x8xf32, #tpu.memory_space<vmem>>, %arg12: memref<8x32xf32, #tpu.memory_space<vmem>>, %arg13: memref<1x32xf32, #tpu.memory_space<vmem>>, %arg14: memref<1x32xf32, #tpu.memory_space<vmem>>, %arg15: memref<32x32xf32, #tpu.memory_space<vmem>>, %arg16: memref<1x32xf32, #tpu.memory_space<vmem>>, %arg17: memref<32x8xf32, #tpu.memory_space<vmem>>, %arg18: memref<1x8xf32, #tpu.memory_space<vmem>>, %arg19: memref<2x8xf32, #tpu.memory_space<vmem>>) attributes {dimension_semantics = [#tpu.dimension_semantics<parallel>], iteration_bounds = array<i64: 1>, scalar_prefetch = 0 : i64, scratch_operands = 0 : i64, tpu.core_type = #tpu.core_type<tc>, window_params = [{transform_indices = @transform_0, window_bounds = array<i64: 2, 1024>}, {transform_indices = @transform_1, window_bounds = array<i64: 2, 1>}, {pipeline_mode = #tpu.pipeline_mode<synchronous>, transform_indices = @transform_2, window_bounds = array<i64: 1, 16>}, {pipeline_mode = #tpu.pipeline_mode<synchronous>, transform_indices = @transform_3, window_bounds = array<i64: 1, 16>}, {pipeline_mode = #tpu.pipeline_mode<synchronous>, transform_indices = @transform_4, window_bounds = array<i64: 1024, 64>}, {pipeline_mode = #tpu.pipeline_mode<synchronous>, transform_indices = @transform_5, window_bounds = array<i64: 1, 64>}, {pipeline_mode = #tpu.pipeline_mode<synchronous>, transform_indices = @transform_6, window_bounds = array<i64: 16, 16>}, {pipeline_mode = #tpu.pipeline_mode<synchronous>, transform_indices = @transform_7, window_bounds = array<i64: 1, 16>}, {pipeline_mode = #tpu.pipeline_mode<synchronous>, transform_indices = @transform_8, window_bounds = array<i64: 64, 8>}, {pipeline_mode = #tpu.pipeline_mode<synchronous>, transform_indices = @transform_9, window_bounds = array<i64: 16, 8>}, {pipeline_mode = #tpu.pipeline_mode<synchronous>, transform_indices = @transform_10, window_bounds = array<i64: 1, 8>}, {pipeline_mode = #tpu.pipeline_mode<synchronous>, transform_indices = @transform_11, window_bounds = array<i64: 8, 32>}, {pipeline_mode = #tpu.pipeline_mode<synchronous>, transform_indices = @transform_12, window_bounds = array<i64: 1, 32>}, {pipeline_mode = #tpu.pipeline_mode<synchronous>, transform_indices = @transform_13, window_bounds = array<i64: 1, 32>}, {pipeline_mode = #tpu.pipeline_mode<synchronous>, transform_indices = @transform_14, window_bounds = array<i64: 32, 32>}, {pipeline_mode = #tpu.pipeline_mode<synchronous>, transform_indices = @transform_15, window_bounds = array<i64: 1, 32>}, {pipeline_mode = #tpu.pipeline_mode<synchronous>, transform_indices = @transform_16, window_bounds = array<i64: 32, 8>}, {pipeline_mode = #tpu.pipeline_mode<synchronous>, transform_indices = @transform_17, window_bounds = array<i64: 1, 8>}, {transform_indices = @transform_18, window_bounds = array<i64: 2, 8>}]} {
    %c0 = arith.constant 0 : index
    %c0_0 = arith.constant 0 : index
    %0 = vector.load %arg2[%c0, %c0_0] : memref<2x1xf32, #tpu.memory_space<vmem>>, vector<2x1xf32>
    %c0_1 = arith.constant 0 : index
    %c0_2 = arith.constant 0 : index
    %1 = vector.load %arg1[%c0_1, %c0_2] : memref<2x1024xf32, #tpu.memory_space<vmem>>, vector<2x1024xf32>
    %2 = arith.truncf %1 : vector<2x1024xf32> to vector<2x1024xbf16>
    %c0_3 = arith.constant 0 : index
    %c0_4 = arith.constant 0 : index
    %3 = vector.load %arg5[%c0_3, %c0_4] : memref<1024x64xbf16, #tpu.memory_space<vmem>>, vector<1024x64xbf16>
    %cst = arith.constant dense<0.000000e+00> : vector<2x64xf32>
    %4 = tpu.matmul %2, %3, %cst {dimension_numbers = #tpu.dot_dimension_numbers<[1], [0], [0], [1], [0, 0, 1, 1], [], []>} : vector<2x1024xbf16>, vector<1024x64xbf16>, vector<2x64xf32> -> vector<2x64xf32>
    %c0_5 = arith.constant 0 : index
    %c0_6 = arith.constant 0 : index
    %5 = vector.load %arg6[%c0_5, %c0_6] : memref<1x64xf32, #tpu.memory_space<vmem>>, vector<1x64xf32>
    %6 = vector.broadcast %5 : vector<1x64xf32> to vector<2x64xf32>
    %7 = arith.addf %4, %6 : vector<2x64xf32>
    %cst_7 = arith.constant 0.000000e+00 : f32
    %8 = vector.broadcast %cst_7 : f32 to vector<2x64xf32>
    %9 = arith.maximumf %7, %8 : vector<2x64xf32>
    %c0_8 = arith.constant 0 : index
    %c0_9 = arith.constant 0 : index
    %10 = vector.load %arg3[%c0_8, %c0_9] : memref<1x16xf32, #tpu.memory_space<vmem>>, vector<1x16xf32>
    %11 = vector.broadcast %0 : vector<2x1xf32> to vector<2x16xf32>
    %12 = vector.broadcast %10 : vector<1x16xf32> to vector<2x16xf32>
    %13 = arith.mulf %11, %12 : vector<2x16xf32>
    %c0_10 = arith.constant 0 : index
    %c0_11 = arith.constant 0 : index
    %14 = vector.load %arg4[%c0_10, %c0_11] : memref<1x16xf32, #tpu.memory_space<vmem>>, vector<1x16xf32>
    %15 = vector.broadcast %14 : vector<1x16xf32> to vector<2x16xf32>
    %16 = arith.addf %13, %15 : vector<2x16xf32>
    %17 = math.sin %16 : vector<2x16xf32>
    %c0_12 = arith.constant 0 : index
    %c0_13 = arith.constant 0 : index
    %18 = vector.load %arg7[%c0_12, %c0_13] : memref<16x16xf32, #tpu.memory_space<vmem>>, vector<16x16xf32>
    %cst_14 = arith.constant dense<0.000000e+00> : vector<2x16xf32>
    %19 = tpu.matmul %17, %18, %cst_14 {dimension_numbers = #tpu.dot_dimension_numbers<[1], [0], [0], [1], [0, 0, 1, 1], [], []>} : vector<2x16xf32>, vector<16x16xf32>, vector<2x16xf32> -> vector<2x16xf32>
    %c0_15 = arith.constant 0 : index
    %c0_16 = arith.constant 0 : index
    %20 = vector.load %arg8[%c0_15, %c0_16] : memref<1x16xf32, #tpu.memory_space<vmem>>, vector<1x16xf32>
    %21 = vector.broadcast %20 : vector<1x16xf32> to vector<2x16xf32>
    %22 = arith.addf %19, %21 : vector<2x16xf32>
    %cst_17 = arith.constant 0.000000e+00 : f32
    %23 = vector.broadcast %cst_17 : f32 to vector<2x16xf32>
    %24 = arith.maximumf %22, %23 : vector<2x16xf32>
    %c0_18 = arith.constant 0 : index
    %c0_19 = arith.constant 0 : index
    %25 = vector.load %arg9[%c0_18, %c0_19] : memref<64x8xf32, #tpu.memory_space<vmem>>, vector<64x8xf32>
    %cst_20 = arith.constant dense<0.000000e+00> : vector<2x8xf32>
    %26 = tpu.matmul %9, %25, %cst_20 {dimension_numbers = #tpu.dot_dimension_numbers<[1], [0], [0], [1], [0, 0, 1, 1], [], []>} : vector<2x64xf32>, vector<64x8xf32>, vector<2x8xf32> -> vector<2x8xf32>
    %c0_21 = arith.constant 0 : index
    %c0_22 = arith.constant 0 : index
    %27 = vector.load %arg10[%c0_21, %c0_22] : memref<16x8xf32, #tpu.memory_space<vmem>>, vector<16x8xf32>
    %cst_23 = arith.constant dense<0.000000e+00> : vector<2x8xf32>
    %28 = tpu.matmul %24, %27, %cst_23 {dimension_numbers = #tpu.dot_dimension_numbers<[1], [0], [0], [1], [0, 0, 1, 1], [], []>} : vector<2x16xf32>, vector<16x8xf32>, vector<2x8xf32> -> vector<2x8xf32>
    %29 = arith.addf %26, %28 : vector<2x8xf32>
    %c0_24 = arith.constant 0 : index
    %c0_25 = arith.constant 0 : index
    %30 = vector.load %arg11[%c0_24, %c0_25] : memref<1x8xf32, #tpu.memory_space<vmem>>, vector<1x8xf32>
    %31 = vector.broadcast %30 : vector<1x8xf32> to vector<2x8xf32>
    %32 = arith.addf %29, %31 : vector<2x8xf32>
    %c0_26 = arith.constant 0 : index
    %c0_27 = arith.constant 0 : index
    %33 = vector.load %arg12[%c0_26, %c0_27] : memref<8x32xf32, #tpu.memory_space<vmem>>, vector<8x32xf32>
    %cst_28 = arith.constant dense<0.000000e+00> : vector<2x32xf32>
    %34 = tpu.matmul %32, %33, %cst_28 {dimension_numbers = #tpu.dot_dimension_numbers<[1], [0], [0], [1], [0, 0, 1, 1], [], []>} : vector<2x8xf32>, vector<8x32xf32>, vector<2x32xf32> -> vector<2x32xf32>
    %c0_29 = arith.constant 0 : index
    %c0_30 = arith.constant 0 : index
    %35 = vector.load %arg13[%c0_29, %c0_30] : memref<1x32xf32, #tpu.memory_space<vmem>>, vector<1x32xf32>
    %36 = vector.broadcast %0 : vector<2x1xf32> to vector<2x32xf32>
    %37 = vector.broadcast %35 : vector<1x32xf32> to vector<2x32xf32>
    %38 = arith.mulf %36, %37 : vector<2x32xf32>
    %39 = arith.addf %34, %38 : vector<2x32xf32>
    %c0_31 = arith.constant 0 : index
    %c0_32 = arith.constant 0 : index
    %40 = vector.load %arg14[%c0_31, %c0_32] : memref<1x32xf32, #tpu.memory_space<vmem>>, vector<1x32xf32>
    %41 = vector.broadcast %40 : vector<1x32xf32> to vector<2x32xf32>
    %42 = arith.addf %39, %41 : vector<2x32xf32>
    %cst_33 = arith.constant 0.000000e+00 : f32
    %43 = vector.broadcast %cst_33 : f32 to vector<2x32xf32>
    %44 = arith.maximumf %42, %43 : vector<2x32xf32>
    %c0_34 = arith.constant 0 : index
    %c0_35 = arith.constant 0 : index
    %45 = vector.load %arg15[%c0_34, %c0_35] : memref<32x32xf32, #tpu.memory_space<vmem>>, vector<32x32xf32>
    %cst_36 = arith.constant dense<0.000000e+00> : vector<2x32xf32>
    %46 = tpu.matmul %44, %45, %cst_36 {dimension_numbers = #tpu.dot_dimension_numbers<[1], [0], [0], [1], [0, 0, 1, 1], [], []>} : vector<2x32xf32>, vector<32x32xf32>, vector<2x32xf32> -> vector<2x32xf32>
    %c0_37 = arith.constant 0 : index
    %c0_38 = arith.constant 0 : index
    %47 = vector.load %arg16[%c0_37, %c0_38] : memref<1x32xf32, #tpu.memory_space<vmem>>, vector<1x32xf32>
    %48 = vector.broadcast %47 : vector<1x32xf32> to vector<2x32xf32>
    %49 = arith.addf %46, %48 : vector<2x32xf32>
    %cst_39 = arith.constant 0.000000e+00 : f32
    %50 = vector.broadcast %cst_39 : f32 to vector<2x32xf32>
    %51 = arith.maximumf %49, %50 : vector<2x32xf32>
    %c0_40 = arith.constant 0 : index
    %c0_41 = arith.constant 0 : index
    %52 = vector.load %arg17[%c0_40, %c0_41] : memref<32x8xf32, #tpu.memory_space<vmem>>, vector<32x8xf32>
    %cst_42 = arith.constant dense<0.000000e+00> : vector<2x8xf32>
    %53 = tpu.matmul %51, %52, %cst_42 {dimension_numbers = #tpu.dot_dimension_numbers<[1], [0], [0], [1], [0, 0, 1, 1], [], []>} : vector<2x32xf32>, vector<32x8xf32>, vector<2x8xf32> -> vector<2x8xf32>
    %c0_43 = arith.constant 0 : index
    %c0_44 = arith.constant 0 : index
    %54 = vector.load %arg18[%c0_43, %c0_44] : memref<1x8xf32, #tpu.memory_space<vmem>>, vector<1x8xf32>
    %55 = vector.broadcast %54 : vector<1x8xf32> to vector<2x8xf32>
    %56 = arith.addf %53, %55 : vector<2x8xf32>
    %c0_45 = arith.constant 0 : index
    %c0_46 = arith.constant 0 : index
    %57 = vector.load %arg19[%c0_45, %c0_46] : memref<2x8xf32, #tpu.memory_space<vmem>>, vector<2x8xf32>
    tpu.vector_store %arg19[%c0_45, %c0_46], %56 {strides = array<i32>} : memref<2x8xf32, #tpu.memory_space<vmem>>, vector<2x8xf32>,
    return
  }
  func.func @transform_0(%arg0: i32) -> (i32, i32) {
    %c0_i32 = arith.constant 0 : i32
    %c0_i32_0 = arith.constant 0 : i32
    return %arg0, %c0_i32 : i32, i32
  }
  func.func @transform_1(%arg0: i32) -> (i32, i32) {
    %c0_i32 = arith.constant 0 : i32
    %c0_i32_0 = arith.constant 0 : i32
    return %arg0, %c0_i32 : i32, i32
  }
  func.func @transform_2(%arg0: i32) -> (i32, i32) {
    %c0_i32 = arith.constant 0 : i32
    %c0_i32_0 = arith.constant 0 : i32
    %c0_i32_1 = arith.constant 0 : i32
    return %c0_i32, %c0_i32_0 : i32, i32
  }
  func.func @transform_3(%arg0: i32) -> (i32, i32) {
    %c0_i32 = arith.constant 0 : i32
    %c0_i32_0 = arith.constant 0 : i32
    %c0_i32_1 = arith.constant 0 : i32
    return %c0_i32, %c0_i32_0 : i32, i32
  }
  func.func @transform_4(%arg0: i32) -> (i32, i32) {
    %c0_i32 = arith.constant 0 : i32
    %c0_i32_0 = arith.constant 0 : i32
    %c0_i32_1 = arith.constant 0 : i32
    return %c0_i32, %c0_i32_0 : i32, i32
  }
  func.func @transform_5(%arg0: i32) -> (i32, i32) {
    %c0_i32 = arith.constant 0 : i32
    %c0_i32_0 = arith.constant 0 : i32
    %c0_i32_1 = arith.constant 0 : i32
    return %c0_i32, %c0_i32_0 : i32, i32
  }
  func.func @transform_6(%arg0: i32) -> (i32, i32) {
    %c0_i32 = arith.constant 0 : i32
    %c0_i32_0 = arith.constant 0 : i32
    %c0_i32_1 = arith.constant 0 : i32
    return %c0_i32, %c0_i32_0 : i32, i32
  }
  func.func @transform_7(%arg0: i32) -> (i32, i32) {
    %c0_i32 = arith.constant 0 : i32
    %c0_i32_0 = arith.constant 0 : i32
    %c0_i32_1 = arith.constant 0 : i32
    return %c0_i32, %c0_i32_0 : i32, i32
  }
  func.func @transform_8(%arg0: i32) -> (i32, i32) {
    %c0_i32 = arith.constant 0 : i32
    %c0_i32_0 = arith.constant 0 : i32
    %c0_i32_1 = arith.constant 0 : i32
    return %c0_i32, %c0_i32_0 : i32, i32
  }
  func.func @transform_9(%arg0: i32) -> (i32, i32) {
    %c0_i32 = arith.constant 0 : i32
    %c0_i32_0 = arith.constant 0 : i32
    %c0_i32_1 = arith.constant 0 : i32
    return %c0_i32, %c0_i32_0 : i32, i32
  }
  func.func @transform_10(%arg0: i32) -> (i32, i32) {
    %c0_i32 = arith.constant 0 : i32
    %c0_i32_0 = arith.constant 0 : i32
    %c0_i32_1 = arith.constant 0 : i32
    return %c0_i32, %c0_i32_0 : i32, i32
  }
  func.func @transform_11(%arg0: i32) -> (i32, i32) {
    %c0_i32 = arith.constant 0 : i32
    %c0_i32_0 = arith.constant 0 : i32
    %c0_i32_1 = arith.constant 0 : i32
    return %c0_i32, %c0_i32_0 : i32, i32
  }
  func.func @transform_12(%arg0: i32) -> (i32, i32) {
    %c0_i32 = arith.constant 0 : i32
    %c0_i32_0 = arith.constant 0 : i32
    %c0_i32_1 = arith.constant 0 : i32
    return %c0_i32, %c0_i32_0 : i32, i32
  }
  func.func @transform_13(%arg0: i32) -> (i32, i32) {
    %c0_i32 = arith.constant 0 : i32
    %c0_i32_0 = arith.constant 0 : i32
    %c0_i32_1 = arith.constant 0 : i32
    return %c0_i32, %c0_i32_0 : i32, i32
  }
  func.func @transform_14(%arg0: i32) -> (i32, i32) {
    %c0_i32 = arith.constant 0 : i32
    %c0_i32_0 = arith.constant 0 : i32
    %c0_i32_1 = arith.constant 0 : i32
    return %c0_i32, %c0_i32_0 : i32, i32
  }
  func.func @transform_15(%arg0: i32) -> (i32, i32) {
    %c0_i32 = arith.constant 0 : i32
    %c0_i32_0 = arith.constant 0 : i32
    %c0_i32_1 = arith.constant 0 : i32
    return %c0_i32, %c0_i32_0 : i32, i32
  }
  func.func @transform_16(%arg0: i32) -> (i32, i32) {
    %c0_i32 = arith.constant 0 : i32
    %c0_i32_0 = arith.constant 0 : i32
    %c0_i32_1 = arith.constant 0 : i32
    return %c0_i32, %c0_i32_0 : i32, i32
  }
  func.func @transform_17(%arg0: i32) -> (i32, i32) {
    %c0_i32 = arith.constant 0 : i32
    %c0_i32_0 = arith.constant 0 : i32
    %c0_i32_1 = arith.constant 0 : i32
    return %c0_i32, %c0_i32_0 : i32, i32
  }
  func.func @transform_18(%arg0: i32) -> (i32, i32) {
    %c0_i32 = arith.constant 0 : i32
    %c0_i32_0 = arith.constant 0 : i32
    return %arg0, %c0_i32 : i32, i32
  }
}

</mosaic_0001>

<llo_original>
// kernel: ldm_forward.1
$region0: #{ldm_forward.1}
  #allocation0 [shape = 'u32[]', space=smem, size = 0x4, offset = 0x4, fixed_abs, tag = 'smem constant byte address 0x4 - core index']
  #allocation1 [shape = 'u32[144,128]{1,0:T(1,128)}', space=vmem, size = 0x12000, scoped, tag = 'internal scratch']
  %s0 = inlined_call_operand.vmem [shape: f32[2,1024], index: 0, kind: input, shape index: {}]
  %s1 = inlined_call_operand.vmem [shape: f32[2,1], index: 1, kind: input, shape index: {}]
  %s2 = inlined_call_operand.vmem [shape: f32[1,16], index: 2, kind: input, shape index: {}]
  %s3 = inlined_call_operand.vmem [shape: f32[1,16], index: 3, kind: input, shape index: {}]
  %s4 = inlined_call_operand.vmem [shape: bf16[1024,64], index: 4, kind: input, shape index: {}]
  %s5 = inlined_call_operand.vmem [shape: f32[1,64], index: 5, kind: input, shape index: {}]
  %s6 = inlined_call_operand.vmem [shape: f32[16,16], index: 6, kind: input, shape index: {}]
  %s7 = inlined_call_operand.vmem [shape: f32[1,16], index: 7, kind: input, shape index: {}]
  %s8 = inlined_call_operand.vmem [shape: f32[64,8], index: 8, kind: input, shape index: {}]
  %s9 = inlined_call_operand.vmem [shape: f32[16,8], index: 9, kind: input, shape index: {}]
  %s10 = inlined_call_operand.vmem [shape: f32[1,8], index: 10, kind: input, shape index: {}]
  %s11 = inlined_call_operand.vmem [shape: f32[8,32], index: 11, kind: input, shape index: {}]
  %s12 = inlined_call_operand.vmem [shape: f32[1,32], index: 12, kind: input, shape index: {}]
  %s13 = inlined_call_operand.vmem [shape: f32[1,32], index: 13, kind: input, shape index: {}]
  %s14 = inlined_call_operand.vmem [shape: f32[32,32], index: 14, kind: input, shape index: {}]
  %s15 = inlined_call_operand.vmem [shape: f32[1,32], index: 15, kind: input, shape index: {}]
  %s16 = inlined_call_operand.vmem [shape: f32[32,8], index: 16, kind: input, shape index: {}]
  %s17 = inlined_call_operand.vmem [shape: f32[1,8], index: 17, kind: input, shape index: {}]
  %s18 = inlined_call_operand.hbm [shape: f32[2,8], index: 18, kind: output, shape index: {}]
  %s19 = sld [smem:[#allocation0]]
  $region82: #{ldm_forward.1} parent=0
    _
  %s21 = ssub.s32 1, %s19
  %s22 = scalar_select 0, %s21, %s19
  $region1: #{ldm_forward.1} parent=0
    #allocation2 [shape = 'u8[1024]{0}', space=vmem, size = 0x400, scoped, tag = 'output window, operand 0, single buffered']
    #allocation3 [shape = 's32[1]{0}', space=sflag, size = 0x4, scoped, tag = 'scoped memory for ldm_forward.1']
    %23 = vsyncpa [#allocation3], 0
    // Predicated region
    $region2: #{ldm_forward.1} parent=1 // pred_check
      _
    $region3: #{ldm_forward.1} parent=1 // pred_check_branch
      %25 = sbr.rel (0) target = $region5
    $region4: #{ldm_forward.1} parent=1 // pred_region
      _
    $region5: #{ldm_forward.1} parent=1 // pred_fallthru
      _
    // Predicated region
    $region6: #{ldm_forward.1} parent=1 // pred_check
      _
    $region7: #{ldm_forward.1} parent=1 // pred_check_branch
      %27 = sbr.rel (0) target = $region9
    $region8: #{ldm_forward.1} parent=1 // pred_region
      _
    $region9: #{ldm_forward.1} parent=1 // pred_fallthru
      _
    // Predicated region
    $region10: #{ldm_forward.1} parent=1 // pred_check
      _
    $region11: #{ldm_forward.1} parent=1 // pred_check_branch
      %29 = sbr.rel (0) target = $region13
    $region12: #{ldm_forward.1} parent=1 // pred_region
      _
    $region13: #{ldm_forward.1} parent=1 // pred_fallthru
      _
    // Predicated region
    $region14: #{ldm_forward.1} parent=1 // pred_check
      _
    $region15: #{ldm_forward.1} parent=1 // pred_check_branch
      %31 = sbr.rel (0) target = $region17
    $region16: #{ldm_forward.1} parent=1 // pred_region
      _
    $region17: #{ldm_forward.1} parent=1 // pred_fallthru
      _
    // Predicated region
    $region18: #{ldm_forward.1} parent=1 // pred_check
      _
    $region19: #{ldm_forward.1} parent=1 // pred_check_branch
      %33 = sbr.rel (0) target = $region21
    $region20: #{ldm_forward.1} parent=1 // pred_region
      _
    $region21: #{ldm_forward.1} parent=1 // pred_fallthru
      _
    // Predicated region
    $region22: #{ldm_forward.1} parent=1 // pred_check
      _
    $region23: #{ldm_forward.1} parent=1 // pred_check_branch
      %35 = sbr.rel (0) target = $region25
    $region24: #{ldm_forward.1} parent=1 // pred_region
      _
    $region25: #{ldm_forward.1} parent=1 // pred_fallthru
      _
    // Predicated region
    $region26: #{ldm_forward.1} parent=1 // pred_check
      _
    $region27: #{ldm_forward.1} parent=1 // pred_check_branch
      %37 = sbr.rel (0) target = $region29
    $region28: #{ldm_forward.1} parent=1 // pred_region
      _
    $region29: #{ldm_forward.1} parent=1 // pred_fallthru
      _
    // Predicated region
    $region30: #{ldm_forward.1} parent=1 // pred_check
      _
    $region31: #{ldm_forward.1} parent=1 // pred_check_branch
      %39 = sbr.rel (0) target = $region33
    $region32: #{ldm_forward.1} parent=1 // pred_region
      _
    $region33: #{ldm_forward.1} parent=1 // pred_fallthru
      _
    // Predicated region
    $region34: #{ldm_forward.1} parent=1 // pred_check
      _
    $region35: #{ldm_forward.1} parent=1 // pred_check_branch
      %41 = sbr.rel (0) target = $region37
    $region36: #{ldm_forward.1} parent=1 // pred_region
      _
    $region37: #{ldm_forward.1} parent=1 // pred_fallthru
      _
    // Predicated region
    $region38: #{ldm_forward.1} parent=1 // pred_check
      _
    $region39: #{ldm_forward.1} parent=1 // pred_check_branch
      %43 = sbr.rel (0) target = $region41
    $region40: #{ldm_forward.1} parent=1 // pred_region
      _
    $region41: #{ldm_forward.1} parent=1 // pred_fallthru
      _
    // Predicated region
    $region42: #{ldm_forward.1} parent=1 // pred_check
      _
    $region43: #{ldm_forward.1} parent=1 // pred_check_branch
      %45 = sbr.rel (0) target = $region45
    $region44: #{ldm_forward.1} parent=1 // pred_region
      _
    $region45: #{ldm_forward.1} parent=1 // pred_fallthru
      _
    // Predicated region
    $region46: #{ldm_forward.1} parent=1 // pred_check
      _
    $region47: #{ldm_forward.1} parent=1 // pred_check_branch
      %47 = sbr.rel (0) target = $region49
    $region48: #{ldm_forward.1} parent=1 // pred_region
      _
    $region49: #{ldm_forward.1} parent=1 // pred_fallthru
      _
    // Predicated region
    $region50: #{ldm_forward.1} parent=1 // pred_check
      _
    $region51: #{ldm_forward.1} parent=1 // pred_check_branch
      %49 = sbr.rel (0) target = $region53
    $region52: #{ldm_forward.1} parent=1 // pred_region
      _
    $region53: #{ldm_forward.1} parent=1 // pred_fallthru
      _
    // Predicated region
    $region54: #{ldm_forward.1} parent=1 // pred_check
      _
    $region55: #{ldm_forward.1} parent=1 // pred_check_branch
      %51 = sbr.rel (0) target = $region57
    $region56: #{ldm_forward.1} parent=1 // pred_region
      _
    $region57: #{ldm_forward.1} parent=1 // pred_fallthru
      _
    // Predicated region
    $region58: #{ldm_forward.1} parent=1 // pred_check
      _
    $region59: #{ldm_forward.1} parent=1 // pred_check_branch
      %53 = sbr.rel (0) target = $region61
    $region60: #{ldm_forward.1} parent=1 // pred_region
      _
    $region61: #{ldm_forward.1} parent=1 // pred_fallthru
      _
    // Predicated region
    $region62: #{ldm_forward.1} parent=1 // pred_check
      _
    $region63: #{ldm_forward.1} parent=1 // pred_check_branch
      %55 = sbr.rel (0) target = $region65
    $region64: #{ldm_forward.1} parent=1 // pred_region
      _
    $region65: #{ldm_forward.1} parent=1 // pred_fallthru
      _
    // Predicated region
    $region66: #{ldm_forward.1} parent=1 // pred_check
      _
    $region67: #{ldm_forward.1} parent=1 // pred_check_branch
      %57 = sbr.rel (0) target = $region69
    $region68: #{ldm_forward.1} parent=1 // pred_region
      _
    $region69: #{ldm_forward.1} parent=1 // pred_fallthru
      _
    // Predicated region
    $region70: #{ldm_forward.1} parent=1 // pred_check
      _
    $region71: #{ldm_forward.1} parent=1 // pred_check_branch
      %59 = sbr.rel (0) target = $region73
    $region72: #{ldm_forward.1} parent=1 // pred_region
      _
    $region73: #{ldm_forward.1} parent=1 // pred_fallthru
      _
    %v61 = vld [vmem:[%s1] sm:$0x3]
    %v62 = vld [vmem:[%s0] sm:$0xff]
    %v63 = vld [vmem:[%s0 + $0x8] sm:$0xff]
    %v66 = vcombine.high %v62, %v62
    %v68 = vunpack.c.l.s4 1983009808
    %v69 = vunpack.c.0.s8 %v68
    %v70 = vlaneseq
    %v71 = vshrl.u32 %v70, 7
    %v72 = vsub.s32 %v69, %v71
    %v73 = vrot.slane %v62, %v72
    %v75 = vunpack.c.l.s4 1983009808
    %v76 = vunpack.c.0.s8 %v75
    %v77 = vlaneseq
    %v78 = vshrl.u32 %v77, 7
    %v79 = vsub.s32 %v76, %v78
    %v80 = vrot.slane %v66, %v79
    %v81 = vcombine.high %v73, %v73
    %v82 = vcombine.high %v80, %v80
    %v83 = vcombine.high %v63, %v63
    %v85 = vunpack.c.l.s4 1983009808
    %v86 = vunpack.c.0.s8 %v85
    %v87 = vlaneseq
    %v88 = vshrl.u32 %v87, 7
    %v89 = vsub.s32 %v86, %v88
    %v90 = vrot.slane %v63, %v89
    %v92 = vunpack.c.l.s4 1983009808
    %v93 = vunpack.c.0.s8 %v92
    %v94 = vlaneseq
    %v95 = vshrl.u32 %v94, 7
    %v96 = vsub.s32 %v93, %v95
    %v97 = vrot.slane %v83, %v96
    %v98 = vcombine.high %v90, %v90
    %v99 = vcombine.high %v97, %v97
    %v108 = vpack.c.bf16 %v73, %v73
    %v109 = vpack.c.bf16 %v81, %v81
    %v110 = vpack.c.bf16 %v80, %v80
    %v111 = vpack.c.bf16 %v82, %v82
    %v112 = vpack.c.bf16 %v90, %v90
    %v113 = vpack.c.bf16 %v98, %v98
    %v114 = vpack.c.bf16 %v97, %v97
    %v115 = vpack.c.bf16 %v99, %v99
    %v116 = vld [vmem:[%s4] sm:$0xf]
    %v117 = vld [vmem:[%s4 + $0x4] sm:$0xf]
    %v118 = vld [vmem:[%s4 + $0x8] sm:$0xf]
    %v119 = vld [vmem:[%s4 + $0xc] sm:$0xf]
    %v120 = vld [vmem:[%s4 + $0x10] sm:$0xf]
    %v121 = vld [vmem:[%s4 + $0x14] sm:$0xf]
    %v122 = vld [vmem:[%s4 + $0x18] sm:$0xf]
    %v123 = vld [vmem:[%s4 + $0x1c] sm:$0xf]
    %v124 = vld [vmem:[%s4 + $0x20] sm:$0xf]
    %v125 = vld [vmem:[%s4 + $0x24] sm:$0xf]
    %v126 = vld [vmem:[%s4 + $0x28] sm:$0xf]
    %v127 = vld [vmem:[%s4 + $0x2c] sm:$0xf]
    %v128 = vld [vmem:[%s4 + $0x30] sm:$0xf]
    %v129 = vld [vmem:[%s4 + $0x34] sm:$0xf]
    %v130 = vld [vmem:[%s4 + $0x38] sm:$0xf]
    %v131 = vld [vmem:[%s4 + $0x3c] sm:$0xf]
    %v132 = vld [vmem:[%s4 + $0x40] sm:$0xf]
    %v133 = vld [vmem:[%s4 + $0x44] sm:$0xf]
    %v134 = vld [vmem:[%s4 + $0x48] sm:$0xf]
    %v135 = vld [vmem:[%s4 + $0x4c] sm:$0xf]
    %v136 = vld [vmem:[%s4 + $0x50] sm:$0xf]
    %v137 = vld [vmem:[%s4 + $0x54] sm:$0xf]
    %v138 = vld [vmem:[%s4 + $0x58] sm:$0xf]
    %v139 = vld [vmem:[%s4 + $0x5c] sm:$0xf]
    %v140 = vld [vmem:[%s4 + $0x60] sm:$0xf]
    %v141 = vld [vmem:[%s4 + $0x64] sm:$0xf]
    %v142 = vld [vmem:[%s4 + $0x68] sm:$0xf]
    %v143 = vld [vmem:[%s4 + $0x6c] sm:$0xf]
    %v144 = vld [vmem:[%s4 + $0x70] sm:$0xf]
    %v145 = vld [vmem:[%s4 + $0x74] sm:$0xf]
    %v146 = vld [vmem:[%s4 + $0x78] sm:$0xf]
    %v147 = vld [vmem:[%s4 + $0x7c] sm:$0xf]
    %v148 = vld [vmem:[%s4 + $0x80] sm:$0xf]
    %v149 = vld [vmem:[%s4 + $0x84] sm:$0xf]
    %v150 = vld [vmem:[%s4 + $0x88] sm:$0xf]
    %v151 = vld [vmem:[%s4 + $0x8c] sm:$0xf]
    %v152 = vld [vmem:[%s4 + $0x90] sm:$0xf]
    %v153 = vld [vmem:[%s4 + $0x94] sm:$0xf]
    %v154 = vld [vmem:[%s4 + $0x98] sm:$0xf]
    %v155 = vld [vmem:[%s4 + $0x9c] sm:$0xf]
    %v156 = vld [vmem:[%s4 + $0xa0] sm:$0xf]
    %v157 = vld [vmem:[%s4 + $0xa4] sm:$0xf]
    %v158 = vld [vmem:[%s4 + $0xa8] sm:$0xf]
    %v159 = vld [vmem:[%s4 + $0xac] sm:$0xf]
    %v160 = vld [vmem:[%s4 + $0xb0] sm:$0xf]
    %v161 = vld [vmem:[%s4 + $0xb4] sm:$0xf]
    %v162 = vld [vmem:[%s4 + $0xb8] sm:$0xf]
    %v163 = vld [vmem:[%s4 + $0xbc] sm:$0xf]
    %v164 = vld [vmem:[%s4 + $0xc0] sm:$0xf]
    %v165 = vld [vmem:[%s4 + $0xc4] sm:$0xf]
    %v166 = vld [vmem:[%s4 + $0xc8] sm:$0xf]
    %v167 = vld [vmem:[%s4 + $0xcc] sm:$0xf]
    %v168 = vld [vmem:[%s4 + $0xd0] sm:$0xf]
    %v169 = vld [vmem:[%s4 + $0xd4] sm:$0xf]
    %v170 = vld [vmem:[%s4 + $0xd8] sm:$0xf]
    %v171 = vld [vmem:[%s4 + $0xdc] sm:$0xf]
    %v172 = vld [vmem:[%s4 + $0xe0] sm:$0xf]
    %v173 = vld [vmem:[%s4 + $0xe4] sm:$0xf]
    %v174 = vld [vmem:[%s4 + $0xe8] sm:$0xf]
    %v175 = vld [vmem:[%s4 + $0xec] sm:$0xf]
    %v176 = vld [vmem:[%s4 + $0xf0] sm:$0xf]
    %v177 = vld [vmem:[%s4 + $0xf4] sm:$0xf]
    %v178 = vld [vmem:[%s4 + $0xf8] sm:$0xf]
    %v179 = vld [vmem:[%s4 + $0xfc] sm:$0xf]
    %v180 = vld [vmem:[%s4 + $0x100] sm:$0xf]
    %v181 = vld [vmem:[%s4 + $0x104] sm:$0xf]
    %v182 = vld [vmem:[%s4 + $0x108] sm:$0xf]
    %v183 = vld [vmem:[%s4 + $0x10c] sm:$0xf]
    %v184 = vld [vmem:[%s4 + $0x110] sm:$0xf]
    %v185 = vld [vmem:[%s4 + $0x114] sm:$0xf]
    %v186 = vld [vmem:[%s4 + $0x118] sm:$0xf]
    %v187 = vld [vmem:[%s4 + $0x11c] sm:$0xf]
    %v188 = vld [vmem:[%s4 + $0x120] sm:$0xf]
    %v189 = vld [vmem:[%s4 + $0x124] sm:$0xf]
    %v190 = vld [vmem:[%s4 + $0x128] sm:$0xf]
    %v191 = vld [vmem:[%s4 + $0x12c] sm:$0xf]
    %v192 = vld [vmem:[%s4 + $0x130] sm:$0xf]
    %v193 = vld [vmem:[%s4 + $0x134] sm:$0xf]
    %v194 = vld [vmem:[%s4 + $0x138] sm:$0xf]
    %v195 = vld [vmem:[%s4 + $0x13c] sm:$0xf]
    %v196 = vld [vmem:[%s4 + $0x140] sm:$0xf]
    %v197 = vld [vmem:[%s4 + $0x144] sm:$0xf]
    %v198 = vld [vmem:[%s4 + $0x148] sm:$0xf]
    %v199 = vld [vmem:[%s4 + $0x14c] sm:$0xf]
    %v200 = vld [vmem:[%s4 + $0x150] sm:$0xf]
    %v201 = vld [vmem:[%s4 + $0x154] sm:$0xf]
    %v202 = vld [vmem:[%s4 + $0x158] sm:$0xf]
    %v203 = vld [vmem:[%s4 + $0x15c] sm:$0xf]
    %v204 = vld [vmem:[%s4 + $0x160] sm:$0xf]
    %v205 = vld [vmem:[%s4 + $0x164] sm:$0xf]
    %v206 = vld [vmem:[%s4 + $0x168] sm:$0xf]
    %v207 = vld [vmem:[%s4 + $0x16c] sm:$0xf]
    %v208 = vld [vmem:[%s4 + $0x170] sm:$0xf]
    %v209 = vld [vmem:[%s4 + $0x174] sm:$0xf]
    %v210 = vld [vmem:[%s4 + $0x178] sm:$0xf]
    %v211 = vld [vmem:[%s4 + $0x17c] sm:$0xf]
    %v212 = vld [vmem:[%s4 + $0x180] sm:$0xf]
    %v213 = vld [vmem:[%s4 + $0x184] sm:$0xf]
    %v214 = vld [vmem:[%s4 + $0x188] sm:$0xf]
    %v215 = vld [vmem:[%s4 + $0x18c] sm:$0xf]
    %v216 = vld [vmem:[%s4 + $0x190] sm:$0xf]
    %v217 = vld [vmem:[%s4 + $0x194] sm:$0xf]
    %v218 = vld [vmem:[%s4 + $0x198] sm:$0xf]
    %v219 = vld [vmem:[%s4 + $0x19c] sm:$0xf]
    %v220 = vld [vmem:[%s4 + $0x1a0] sm:$0xf]
    %v221 = vld [vmem:[%s4 + $0x1a4] sm:$0xf]
    %v222 = vld [vmem:[%s4 + $0x1a8] sm:$0xf]
    %v223 = vld [vmem:[%s4 + $0x1ac] sm:$0xf]
    %v224 = vld [vmem:[%s4 + $0x1b0] sm:$0xf]
    %v225 = vld [vmem:[%s4 + $0x1b4] sm:$0xf]
    %v226 = vld [vmem:[%s4 + $0x1b8] sm:$0xf]
    %v227 = vld [vmem:[%s4 + $0x1bc] sm:$0xf]
    %v228 = vld [vmem:[%s4 + $0x1c0] sm:$0xf]
    %v229 = vld [vmem:[%s4 + $0x1c4] sm:$0xf]
    %v230 = vld [vmem:[%s4 + $0x1c8] sm:$0xf]
    %v231 = vld [vmem:[%s4 + $0x1cc] sm:$0xf]
    %v232 = vld [vmem:[%s4 + $0x1d0] sm:$0xf]
    %v233 = vld [vmem:[%s4 + $0x1d4] sm:$0xf]
    %v234 = vld [vmem:[%s4 + $0x1d8] sm:$0xf]
    %v235 = vld [vmem:[%s4 + $0x1dc] sm:$0xf]
    %v236 = vld [vmem:[%s4 + $0x1e0] sm:$0xf]
    %v237 = vld [vmem:[%s4 + $0x1e4] sm:$0xf]
    %v238 = vld [vmem:[%s4 + $0x1e8] sm:$0xf]
    %v239 = vld [vmem:[%s4 + $0x1ec] sm:$0xf]
    %v240 = vld [vmem:[%s4 + $0x1f0] sm:$0xf]
    %v241 = vld [vmem:[%s4 + $0x1f4] sm:$0xf]
    %v242 = vld [vmem:[%s4 + $0x1f8] sm:$0xf]
    %v243 = vld [vmem:[%s4 + $0x1fc] sm:$0xf]
    %v244 = vld [vmem:[%s5] sm:$0x1]
    %v246 = vlaneseq
    %v247 = vshrl.u32 %v246, 7
    %v248 = vsub.s32 0, %v247
    %v249 = vrot.slane %v244, %v248
    %v379 = vunpack.c.l.b16 %v116
    %v380 = vunpack.c.l.b16 %v117
    %v381 = vunpack.c.l.b16 %v118
    %v382 = vunpack.c.l.b16 %v119
    %v383 = vunpack.c.l.b16 %v120
    %v384 = vunpack.c.l.b16 %v121
    %v385 = vunpack.c.l.b16 %v122
    %v386 = vunpack.c.l.b16 %v123
    %v387 = vunpack.c.l.b16 %v124
    %v388 = vunpack.c.l.b16 %v125
    %v389 = vunpack.c.l.b16 %v126
    %v390 = vunpack.c.l.b16 %v127
    %v391 = vunpack.c.l.b16 %v128
    %v392 = vunpack.c.l.b16 %v129
    %v393 = vunpack.c.l.b16 %v130
    %v394 = vunpack.c.l.b16 %v131
    %v395 = vunpack.c.l.b16 %v132
    %v396 = vunpack.c.l.b16 %v133
    %v397 = vunpack.c.l.b16 %v134
    %v398 = vunpack.c.l.b16 %v135
    %v399 = vunpack.c.l.b16 %v136
    %v400 = vunpack.c.l.b16 %v137
    %v401 = vunpack.c.l.b16 %v138
    %v402 = vunpack.c.l.b16 %v139
    %v403 = vunpack.c.l.b16 %v140
    %v404 = vunpack.c.l.b16 %v141
    %v405 = vunpack.c.l.b16 %v142
    %v406 = vunpack.c.l.b16 %v143
    %v407 = vunpack.c.l.b16 %v144
    %v408 = vunpack.c.l.b16 %v145
    %v409 = vunpack.c.l.b16 %v146
    %v410 = vunpack.c.l.b16 %v147
    %v411 = vunpack.c.l.b16 %v148
    %v412 = vunpack.c.l.b16 %v149
    %v413 = vunpack.c.l.b16 %v150
    %v414 = vunpack.c.l.b16 %v151
    %v415 = vunpack.c.l.b16 %v152
    %v416 = vunpack.c.l.b16 %v153
    %v417 = vunpack.c.l.b16 %v154
    %v418 = vunpack.c.l.b16 %v155
    %v419 = vunpack.c.l.b16 %v156
    %v420 = vunpack.c.l.b16 %v157
    %v421 = vunpack.c.l.b16 %v158
    %v422 = vunpack.c.l.b16 %v159
    %v423 = vunpack.c.l.b16 %v160
    %v424 = vunpack.c.l.b16 %v161
    %v425 = vunpack.c.l.b16 %v162
    %v426 = vunpack.c.l.b16 %v163
    %v427 = vunpack.c.l.b16 %v164
    %v428 = vunpack.c.l.b16 %v165
    %v429 = vunpack.c.l.b16 %v166
    %v430 = vunpack.c.l.b16 %v167
    %v431 = vunpack.c.l.b16 %v168
    %v432 = vunpack.c.l.b16 %v169
    %v433 = vunpack.c.l.b16 %v170
    %v434 = vunpack.c.l.b16 %v171
    %v435 = vunpack.c.l.b16 %v172
    %v436 = vunpack.c.l.b16 %v173
    %v437 = vunpack.c.l.b16 %v174
    %v438 = vunpack.c.l.b16 %v175
    %v439 = vunpack.c.l.b16 %v176
    %v440 = vunpack.c.l.b16 %v177
    %v441 = vunpack.c.l.b16 %v178
    %v442 = vunpack.c.l.b16 %v179
    %v443 = vunpack.c.l.b16 %v180
    %v444 = vunpack.c.l.b16 %v181
    %v445 = vunpack.c.l.b16 %v182
    %v446 = vunpack.c.l.b16 %v183
    %v447 = vunpack.c.l.b16 %v184
    %v448 = vunpack.c.l.b16 %v185
    %v449 = vunpack.c.l.b16 %v186
    %v450 = vunpack.c.l.b16 %v187
    %v451 = vunpack.c.l.b16 %v188
    %v452 = vunpack.c.l.b16 %v189
    %v453 = vunpack.c.l.b16 %v190
    %v454 = vunpack.c.l.b16 %v191
    %v455 = vunpack.c.l.b16 %v192
    %v456 = vunpack.c.l.b16 %v193
    %v457 = vunpack.c.l.b16 %v194
    %v458 = vunpack.c.l.b16 %v195
    %v459 = vunpack.c.l.b16 %v196
    %v460 = vunpack.c.l.b16 %v197
    %v461 = vunpack.c.l.b16 %v198
    %v462 = vunpack.c.l.b16 %v199
    %v463 = vunpack.c.l.b16 %v200
    %v464 = vunpack.c.l.b16 %v201
    %v465 = vunpack.c.l.b16 %v202
    %v466 = vunpack.c.l.b16 %v203
    %v467 = vunpack.c.l.b16 %v204
    %v468 = vunpack.c.l.b16 %v205
    %v469 = vunpack.c.l.b16 %v206
    %v470 = vunpack.c.l.b16 %v207
    %v471 = vunpack.c.l.b16 %v208
    %v472 = vunpack.c.l.b16 %v209
    %v473 = vunpack.c.l.b16 %v210
    %v474 = vunpack.c.l.b16 %v211
    %v475 = vunpack.c.l.b16 %v212
    %v476 = vunpack.c.l.b16 %v213
    %v477 = vunpack.c.l.b16 %v214
    %v478 = vunpack.c.l.b16 %v215
    %v479 = vunpack.c.l.b16 %v216
    %v480 = vunpack.c.l.b16 %v217
    %v481 = vunpack.c.l.b16 %v218
    %v482 = vunpack.c.l.b16 %v219
    %v483 = vunpack.c.l.b16 %v220
    %v484 = vunpack.c.l.b16 %v221
    %v485 = vunpack.c.l.b16 %v222
    %v486 = vunpack.c.l.b16 %v223
    %v487 = vunpack.c.l.b16 %v224
    %v488 = vunpack.c.l.b16 %v225
    %v489 = vunpack.c.l.b16 %v226
    %v490 = vunpack.c.l.b16 %v227
    %v491 = vunpack.c.l.b16 %v228
    %v492 = vunpack.c.l.b16 %v229
    %v493 = vunpack.c.l.b16 %v230
    %v494 = vunpack.c.l.b16 %v231
    %v495 = vunpack.c.l.b16 %v232
    %v496 = vunpack.c.l.b16 %v233
    %v497 = vunpack.c.l.b16 %v234
    %v498 = vunpack.c.l.b16 %v235
    %v499 = vunpack.c.l.b16 %v236
    %v500 = vunpack.c.l.b16 %v237
    %v501 = vunpack.c.l.b16 %v238
    %v502 = vunpack.c.l.b16 %v239
    %v503 = vunpack.c.l.b16 %v240
    %v504 = vunpack.c.l.b16 %v241
    %v505 = vunpack.c.l.b16 %v242
    %v506 = vunpack.c.l.b16 %v243
    %v507 = vpack.c.b16 %v380, %v379
    %v508 = vpack.c.b16 %v382, %v381
    %v509 = vpack.c.b16 %v384, %v383
    %v510 = vpack.c.b16 %v386, %v385
    %v511 = vpack.c.b16 %v388, %v387
    %v512 = vpack.c.b16 %v390, %v389
    %v513 = vpack.c.b16 %v392, %v391
    %v514 = vpack.c.b16 %v394, %v393
    %v515 = vpack.c.b16 %v396, %v395
    %v516 = vpack.c.b16 %v398, %v397
    %v517 = vpack.c.b16 %v400, %v399
    %v518 = vpack.c.b16 %v402, %v401
    %v519 = vpack.c.b16 %v404, %v403
    %v520 = vpack.c.b16 %v406, %v405
    %v521 = vpack.c.b16 %v408, %v407
    %v522 = vpack.c.b16 %v410, %v409
    %v523 = vpack.c.b16 %v412, %v411
    %v524 = vpack.c.b16 %v414, %v413
    %v525 = vpack.c.b16 %v416, %v415
    %v526 = vpack.c.b16 %v418, %v417
    %v527 = vpack.c.b16 %v420, %v419
    %v528 = vpack.c.b16 %v422, %v421
    %v529 = vpack.c.b16 %v424, %v423
    %v530 = vpack.c.b16 %v426, %v425
    %v531 = vpack.c.b16 %v428, %v427
    %v532 = vpack.c.b16 %v430, %v429
    %v533 = vpack.c.b16 %v432, %v431
    %v534 = vpack.c.b16 %v434, %v433
    %v535 = vpack.c.b16 %v436, %v435
    %v536 = vpack.c.b16 %v438, %v437
    %v537 = vpack.c.b16 %v440, %v439
    %v538 = vpack.c.b16 %v442, %v441
    %v539 = vpack.c.b16 %v444, %v443
    %v540 = vpack.c.b16 %v446, %v445
    %v541 = vpack.c.b16 %v448, %v447
    %v542 = vpack.c.b16 %v450, %v449
    %v543 = vpack.c.b16 %v452, %v451
    %v544 = vpack.c.b16 %v454, %v453
    %v545 = vpack.c.b16 %v456, %v455
    %v546 = vpack.c.b16 %v458, %v457
    %v547 = vpack.c.b16 %v460, %v459
    %v548 = vpack.c.b16 %v462, %v461
    %v549 = vpack.c.b16 %v464, %v463
    %v550 = vpack.c.b16 %v466, %v465
    %v551 = vpack.c.b16 %v468, %v467
    %v552 = vpack.c.b16 %v470, %v469
    %v553 = vpack.c.b16 %v472, %v471
    %v554 = vpack.c.b16 %v474, %v473
    %v555 = vpack.c.b16 %v476, %v475
    %v556 = vpack.c.b16 %v478, %v477
    %v557 = vpack.c.b16 %v480, %v479
    %v558 = vpack.c.b16 %v482, %v481
    %v559 = vpack.c.b16 %v484, %v483
    %v560 = vpack.c.b16 %v486, %v485
    %v561 = vpack.c.b16 %v488, %v487
    %v562 = vpack.c.b16 %v490, %v489
    %v563 = vpack.c.b16 %v492, %v491
    %v564 = vpack.c.b16 %v494, %v493
    %v565 = vpack.c.b16 %v496, %v495
    %v566 = vpack.c.b16 %v498, %v497
    %v567 = vpack.c.b16 %v500, %v499
    %v568 = vpack.c.b16 %v502, %v501
    %v569 = vpack.c.b16 %v504, %v503
    %v570 = vpack.c.b16 %v506, %v505
    %635 = vmatprep.subr.bf16.mxu0 0
    %636 = vmatpush1.bf16.msra.mxu0 %v507
    %637 = vmatprep.subr.bf16.mxu0 0
    %638 = vmatpush1.bf16.msra.mxu0 %v508
    %639 = vmatprep.subr.bf16.mxu0 0
    %640 = vmatpush1.bf16.msra.mxu0 %v509
    %641 = vmatprep.subr.bf16.mxu0 0
    %642 = vmatpush1.bf16.msra.mxu0 %v510
    %643 = vmatprep.subr.bf16.mxu0 0
    %644 = vmatpush1.bf16.msra.mxu0 %v511
    %645 = vmatprep.subr.bf16.mxu0 0
    %646 = vmatpush1.bf16.msra.mxu0 %v512
    %647 = vmatprep.subr.bf16.mxu0 0
    %648 = vmatpush1.bf16.msra.mxu0 %v513
    %649 = vmatprep.subr.bf16.mxu0 0
    %650 = vmatpush1.bf16.msra.mxu0 %v514
    %651 = vmatprep.subr.bf16.mxu0 0
    %652 = vmatpush1.bf16.msra.mxu0 %v515
    %653 = vmatprep.subr.bf16.mxu0 0
    %654 = vmatpush1.bf16.msra.mxu0 %v516
    %655 = vmatprep.subr.bf16.mxu0 0
    %656 = vmatpush1.bf16.msra.mxu0 %v517
    %657 = vmatprep.subr.bf16.mxu0 0
    %658 = vmatpush1.bf16.msra.mxu0 %v518
    %659 = vmatprep.subr.bf16.mxu0 0
    %660 = vmatpush1.bf16.msra.mxu0 %v519
    %661 = vmatprep.subr.bf16.mxu0 0
    %662 = vmatpush1.bf16.msra.mxu0 %v520
    %663 = vmatprep.subr.bf16.mxu0 0
    %664 = vmatpush1.bf16.msra.mxu0 %v521
    %665 = vmatprep.subr.bf16.mxu0 0
    %666 = vmatpush1.bf16.msra.mxu0 %v522
    %667 = vmatprep.mubr.bf16.mxu0 %v109
    %668 = vmatmul.mubr.bf16.gmra.mrb[0].mxu0 %v108
    %v669 = vpop.f32.mrb[0].mxu0
    %v670 = vadd.f32 %v249, %v669
    %v671 = vpop.f32.mrb[0].mxu0
    %v672 = vpop.f32.mrb[0].mxu0
    %v673 = vpop.f32.mrb[0].mxu0
    %674 = vdwg.mxu0
    %675 = vmatprep.subr.bf16.mxu0 0
    %676 = vmatpush1.bf16.msra.mxu0 %v523
    %677 = vmatprep.subr.bf16.mxu0 0
    %678 = vmatpush1.bf16.msra.mxu0 %v524
    %679 = vmatprep.subr.bf16.mxu0 0
    %680 = vmatpush1.bf16.msra.mxu0 %v525
    %681 = vmatprep.subr.bf16.mxu0 0
    %682 = vmatpush1.bf16.msra.mxu0 %v526
    %683 = vmatprep.subr.bf16.mxu0 0
    %684 = vmatpush1.bf16.msra.mxu0 %v527
    %685 = vmatprep.subr.bf16.mxu0 0
    %686 = vmatpush1.bf16.msra.mxu0 %v528
    %687 = vmatprep.subr.bf16.mxu0 0
    %688 = vmatpush1.bf16.msra.mxu0 %v529
    %689 = vmatprep.subr.bf16.mxu0 0
    %690 = vmatpush1.bf16.msra.mxu0 %v530
    %691 = vmatprep.subr.bf16.mxu0 0
    %692 = vmatpush1.bf16.msra.mxu0 %v531
    %693 = vmatprep.subr.bf16.mxu0 0
    %694 = vmatpush1.bf16.msra.mxu0 %v532
    %695 = vmatprep.subr.bf16.mxu0 0
    %696 = vmatpush1.bf16.msra.mxu0 %v533
    %697 = vmatprep.subr.bf16.mxu0 0
    %698 = vmatpush1.bf16.msra.mxu0 %v534
    %699 = vmatprep.subr.bf16.mxu0 0
    %700 = vmatpush1.bf16.msra.mxu0 %v535
    %701 = vmatprep.subr.bf16.mxu0 0
    %702 = vmatpush1.bf16.msra.mxu0 %v536
    %703 = vmatprep.subr.bf16.mxu0 0
    %704 = vmatpush1.bf16.msra.mxu0 %v537
    %705 = vmatprep.subr.bf16.mxu0 0
    %706 = vmatpush1.bf16.msra.mxu0 %v538
    %707 = vmatprep.mubr.bf16.mxu0 %v111
    %708 = vmatmul.mubr.bf16.gmra.mrb[0].mxu0 %v110
    %v709 = vpop.f32.mrb[0].mxu0
    %v710 = vadd.f32 %v670, %v709
    %v711 = vpop.f32.mrb[0].mxu0
    %v712 = vpop.f32.mrb[0].mxu0
    %v713 = vpop.f32.mrb[0].mxu0
    %714 = vdwg.mxu0
    %715 = vmatprep.subr.bf16.mxu0 0
    %716 = vmatpush1.bf16.msra.mxu0 %v539
    %717 = vmatprep.subr.bf16.mxu0 0
    %718 = vmatpush1.bf16.msra.mxu0 %v540
    %719 = vmatprep.subr.bf16.mxu0 0
    %720 = vmatpush1.bf16.msra.mxu0 %v541
    %721 = vmatprep.subr.bf16.mxu0 0
    %722 = vmatpush1.bf16.msra.mxu0 %v542
    %723 = vmatprep.subr.bf16.mxu0 0
    %724 = vmatpush1.bf16.msra.mxu0 %v543
    %725 = vmatprep.subr.bf16.mxu0 0
    %726 = vmatpush1.bf16.msra.mxu0 %v544
    %727 = vmatprep.subr.bf16.mxu0 0
    %728 = vmatpush1.bf16.msra.mxu0 %v545
    %729 = vmatprep.subr.bf16.mxu0 0
    %730 = vmatpush1.bf16.msra.mxu0 %v546
    %731 = vmatprep.subr.bf16.mxu0 0
    %732 = vmatpush1.bf16.msra.mxu0 %v547
    %733 = vmatprep.subr.bf16.mxu0 0
    %734 = vmatpush1.bf16.msra.mxu0 %v548
    %735 = vmatprep.subr.bf16.mxu0 0
    %736 = vmatpush1.bf16.msra.mxu0 %v549
    %737 = vmatprep.subr.bf16.mxu0 0
    %738 = vmatpush1.bf16.msra.mxu0 %v550
    %739 = vmatprep.subr.bf16.mxu0 0
    %740 = vmatpush1.bf16.msra.mxu0 %v551
    %741 = vmatprep.subr.bf16.mxu0 0
    %742 = vmatpush1.bf16.msra.mxu0 %v552
    %743 = vmatprep.subr.bf16.mxu0 0
    %744 = vmatpush1.bf16.msra.mxu0 %v553
    %745 = vmatprep.subr.bf16.mxu0 0
    %746 = vmatpush1.bf16.msra.mxu0 %v554
    %747 = vmatprep.mubr.bf16.mxu0 %v113
    %748 = vmatmul.mubr.bf16.gmra.mrb[0].mxu0 %v112
    %v749 = vpop.f32.mrb[0].mxu0
    %v750 = vadd.f32 %v710, %v749
    %v751 = vpop.f32.mrb[0].mxu0
    %v752 = vpop.f32.mrb[0].mxu0
    %v753 = vpop.f32.mrb[0].mxu0
    %754 = vdwg.mxu0
    %755 = vmatprep.subr.bf16.mxu0 0
    %756 = vmatpush1.bf16.msra.mxu0 %v555
    %757 = vmatprep.subr.bf16.mxu0 0
    %758 = vmatpush1.bf16.msra.mxu0 %v556
    %759 = vmatprep.subr.bf16.mxu0 0
    %760 = vmatpush1.bf16.msra.mxu0 %v557
    %761 = vmatprep.subr.bf16.mxu0 0
    %762 = vmatpush1.bf16.msra.mxu0 %v558
    %763 = vmatprep.subr.bf16.mxu0 0
    %764 = vmatpush1.bf16.msra.mxu0 %v559
    %765 = vmatprep.subr.bf16.mxu0 0
    %766 = vmatpush1.bf16.msra.mxu0 %v560
    %767 = vmatprep.subr.bf16.mxu0 0
    %768 = vmatpush1.bf16.msra.mxu0 %v561
    %769 = vmatprep.subr.bf16.mxu0 0
    %770 = vmatpush1.bf16.msra.mxu0 %v562
    %771 = vmatprep.subr.bf16.mxu0 0
    %772 = vmatpush1.bf16.msra.mxu0 %v563
    %773 = vmatprep.subr.bf16.mxu0 0
    %774 = vmatpush1.bf16.msra.mxu0 %v564
    %775 = vmatprep.subr.bf16.mxu0 0
    %776 = vmatpush1.bf16.msra.mxu0 %v565
    %777 = vmatprep.subr.bf16.mxu0 0
    %778 = vmatpush1.bf16.msra.mxu0 %v566
    %779 = vmatprep.subr.bf16.mxu0 0
    %780 = vmatpush1.bf16.msra.mxu0 %v567
    %781 = vmatprep.subr.bf16.mxu0 0
    %782 = vmatpush1.bf16.msra.mxu0 %v568
    %783 = vmatprep.subr.bf16.mxu0 0
    %784 = vmatpush1.bf16.msra.mxu0 %v569
    %785 = vmatprep.subr.bf16.mxu0 0
    %786 = vmatpush1.bf16.msra.mxu0 %v570
    %787 = vmatprep.mubr.bf16.mxu0 %v115
    %788 = vmatmul.mubr.bf16.gmra.mrb[0].mxu0 %v114
    %v789 = vpop.f32.mrb[0].mxu0
    %v790 = vadd.f32 %v750, %v789
    %v791 = vpop.f32.mrb[0].mxu0
    %v792 = vpop.f32.mrb[0].mxu0
    %v793 = vpop.f32.mrb[0].mxu0
    %794 = vdwg.mxu0
    %v795 = vmax.f32 %v790, 0.0
    %v796 = vld [vmem:[%s2] sm:$0x1]
    %798 = vset.pattern.permute.xlu0 0
    %799 = vperm.xlu0 %798, %v61
    %v800 = vpop.permute.xlu0 %799
    %v803 = vlaneseq
    %v804 = vshrl.u32 %v803, 7
    %v805 = vsub.s32 0, %v804
    %v806 = vrot.slane %v796, %v805
    %v808 = vmul.f32 %v800, %v806
    %v809 = vld [vmem:[%s3] sm:$0x1]
    %v811 = vlaneseq
    %v812 = vshrl.u32 %v811, 7
    %v813 = vsub.s32 0, %v812
    %v814 = vrot.slane %v809, %v813
    %v816 = vadd.f32 %v808, %v814
    %v817 = vand.u32 2147483647, %v816
    %vm818 = vcmp.le.f32.partialorder %v817, 0.7853982
    %vm819 = vcmp.lt.s32.totalorder %v816, 0
    %v820 = vand.u32 %v816, 2139095040
    %v821 = vshrl.u32 %v820, 23
    %v822 = vsub.s32 %v821, 127
    %v823 = vand.u32 2147483647, %v816
    %v824 = vand.u32 %v823, 8388607
    %v825 = vor.u32 %v824, 8388608
    %v826 = vsub.s32 0, %v825
    %v827 = vadd.s32 %v822, 1
    %vm828 = vcmp.gt.s32.totalorder %v827, 0
    %v829 = vsel %vm828, %v827, 0
    %v830 = vshrl.u32 %v829, 5
    %v831 = vand.u32 %v829, 31
    %v832 = vsub.s32 32, %v831
    %v833 = vshrl.u32 683565275, %v832
    %v834 = vshll.u32 683565275, %v831
    %v835 = vshrl.u32 2475754826, %v832
    %v836 = vor.u32 %v834, %v835
    %v837 = vshll.u32 2475754826, %v831
    %v838 = vshrl.u32 2131351028, %v832
    %v839 = vor.u32 %v837, %v838
    %v840 = vshll.u32 2131351028, %v831
    %v841 = vshrl.u32 2102212464, %v832
    %v842 = vor.u32 %v840, %v841
    %v843 = vshll.u32 2102212464, %v831
    %v844 = vshrl.u32 920167782, %v832
    %v845 = vor.u32 %v843, %v844
    %v846 = vshll.u32 920167782, %v831
    %v847 = vshrl.u32 1326507024, %v832
    %v848 = vor.u32 %v846, %v847
    %vm849 = vcmp.lt.s32.totalorder %v830, 1
    %vm850 = vcmp.lt.s32.totalorder %v830, 2
    %vm851 = vcmp.lt.s32.totalorder %v830, 3
    %vm852 = vcmp.lt.s32.totalorder %v830, 4
    %v853 = vsel %vm849, %v833, %v836
    %v854 = vsel %vm852, %v842, 2102212464
    %v855 = vsel %vm851, %v839, %v854
    %v856 = vsel %vm850, %v853, %v855
    %v857 = vsel %vm849, %v836, %v839
    %v858 = vsel %vm852, %v845, 920167782
    %v859 = vsel %vm851, %v842, %v858
    %v860 = vsel %vm850, %v857, %v859
    %v861 = vsel %vm849, %v839, %v842
    %v862 = vsel %vm852, %v848, 1326507024
    %v863 = vsel %vm851, %v845, %v862
    %v864 = vsel %vm850, %v861, %v863
    %v865 = vshll.u32 %v825, 8
    %v866 = vmul.u32.u64.compose %v865, %v864
    %v867 = vextract.low.u32 %v866
    %v868 = vextract.high.u32 %v866
    %v869 = vmul.u32.u64.compose %v865, %v860
    %v870 = vextract.low.u32 %v869
    %v871 = vextract.high.u32 %v869
    %v872 = vmul.u32 %v865, %v856
    %v873 = vadd.s32 %v868, %v870
    %vm874 = vc.u32 %v868, %v870
    %v875 = vadd.s32 %v871, 1
    %v876 = vsel %vm874, %v875, %v871
    %v877 = vadd.s32 %v872, %v876
    %v878 = vadd.s32 %v877, 536870912
    %v879 = vshrl.u32 %v878, 30
    %v880 = vshll.u32 %v879, 30
    %v881 = vsub.s32 %v877, %v880
    %vm882 = vcmp.lt.s32.totalorder %v881, 0
    %v883 = vsub.s32 0, %v881
    %v884 = vsel %vm882, %v883, %v881
    %v885 = vclz %v884
    %v886 = vsub.s32 %v885, 2
    %vm887 = vcmp.gt.s32.totalorder 0, %v886
    %v888 = vsel %vm887, 0, %v886
    %v889 = vsub.s32 32, %v888
    %v890 = vshll.u32 %v881, %v888
    %v891 = vshrl.u32 %v873, %v889
    %v892 = vor.u32 %v890, %v891
    %v893 = vsub.s32 4294967266, %v888
    %v894 = vadd.s32 %v893, 127
    %v895 = vshll.u32 %v894, 23
    %v896 = vor.u32 4788187, %v895
    %v897 = vand.u32 2147483647, %v896
    %v899 = vcvt.s32.f32 %v892
    %v900 = vmul.f32 %v899, %v897
    %v901 = vxor.u32 %v900, 2147483648
    %v902 = vsel %vm819, %v901, %v900
    %v903 = vsub.s32 4, %v879
    %v904 = vsel %vm819, %v903, %v879
    %v905 = vsel %vm818, %v816, %v902
    %v906 = vsel %vm818, 0, %v904
    %v907 = vcosq.f32.pop %v905
    %v908 = vsinq.f32.pop %v905
    %vm909 = vweird.f32 %v816
    %v910 = vadd.s32 %v906, 3
    %v911 = vand.u32 %v910, 3
    %vm912 = vcmp.lt.s32.totalorder %v911, 2
    %vm913 = vcmp.eq.s32.totalorder %v911, 0
    %v914 = vxor.u32 %v908, 2147483648
    %v915 = vsel %vm913, %v907, %v914
    %vm916 = vcmp.eq.s32.totalorder %v911, 2
    %v917 = vxor.u32 %v907, 2147483648
    %v918 = vsel %vm916, %v917, %v908
    %v919 = vsel %vm912, %v915, %v918
    %v920 = vsel %vm909, nan, %v919
    %v921 = vld [vmem:[%s6] sm:$0xff]
    %v922 = vld [vmem:[%s6 + $0x8] sm:$0xff]
    %v923 = vld [vmem:[%s7] sm:$0x1]
    %v925 = vlaneseq
    %v926 = vshrl.u32 %v925, 7
    %v927 = vsub.s32 0, %v926
    %v928 = vrot.slane %v923, %v927
    %vm930 = vcmask 130048
    %v932 = vsel %vm930, %v920, 0
    %934 = vmatprep.subr.mxu0 0.0
    %935 = vmatpush1.msra.mxu0 %v921
    %936 = vmatprep.subr.mxu0 0.0
    %937 = vmatpush1.msra.mxu0 %v922
    %938 = vmatprep.subr.mxu0 0.0
    %939 = vmatpush1.msra.mxu0 0.0
    %940 = vmatprep.subr.mxu0 0.0
    %941 = vmatpush1.msra.mxu0 0.0
    %942 = vmatprep.subr.mxu0 0.0
    %943 = vmatpush1.msra.mxu0 0.0
    %944 = vmatprep.subr.mxu0 0.0
    %945 = vmatpush1.msra.mxu0 0.0
    %946 = vmatprep.subr.mxu0 0.0
    %947 = vmatpush1.msra.mxu0 0.0
    %948 = vmatprep.subr.mxu0 0.0
    %949 = vmatpush1.msra.mxu0 0.0
    %950 = vmatprep.subr.mxu0 0.0
    %951 = vmatpush1.msra.mxu0 0.0
    %952 = vmatprep.subr.mxu0 0.0
    %953 = vmatpush1.msra.mxu0 0.0
    %954 = vmatprep.subr.mxu0 0.0
    %955 = vmatpush1.msra.mxu0 0.0
    %956 = vmatprep.subr.mxu0 0.0
    %957 = vmatpush1.msra.mxu0 0.0
    %958 = vmatprep.subr.mxu0 0.0
    %959 = vmatpush1.msra.mxu0 0.0
    %960 = vmatprep.subr.mxu0 0.0
    %961 = vmatpush1.msra.mxu0 0.0
    %962 = vmatprep.subr.mxu0 0.0
    %963 = vmatpush1.msra.mxu0 0.0
    %964 = vmatprep.subr.mxu0 0.0
    %965 = vmatpush1.msra.mxu0 0.0
    %966 = vmatprep.subr.mxu0 0.0
    %967 = vmatpush1.msra.mxu0 0.0
    %968 = vmatprep.subr.mxu0 0.0
    %969 = vmatpush1.msra.mxu0 0.0
    %970 = vmatprep.subr.mxu0 0.0
    %971 = vmatpush1.msra.mxu0 0.0
    %972 = vmatprep.subr.mxu0 0.0
    %973 = vmatpush1.msra.mxu0 0.0
    %974 = vmatprep.subr.mxu0 0.0
    %975 = vmatpush1.msra.mxu0 0.0
    %976 = vmatprep.subr.mxu0 0.0
    %977 = vmatpush1.msra.mxu0 0.0
    %978 = vmatprep.subr.mxu0 0.0
    %979 = vmatpush1.msra.mxu0 0.0
    %980 = vmatprep.subr.mxu0 0.0
    %981 = vmatpush1.msra.mxu0 0.0
    %982 = vmatprep.subr.mxu0 0.0
    %983 = vmatpush1.msra.mxu0 0.0
    %984 = vmatprep.subr.mxu0 0.0
    %985 = vmatpush1.msra.mxu0 0.0
    %986 = vmatprep.subr.mxu0 0.0
    %987 = vmatpush1.msra.mxu0 0.0
    %988 = vmatprep.subr.mxu0 0.0
    %989 = vmatpush1.msra.mxu0 0.0
    %990 = vmatprep.subr.mxu0 0.0
    %991 = vmatpush1.msra.mxu0 0.0
    %992 = vmatprep.subr.mxu0 0.0
    %993 = vmatpush1.msra.mxu0 0.0
    %994 = vmatprep.subr.mxu0 0.0
    %995 = vmatpush1.msra.mxu0 0.0
    %996 = vmatprep.subr.mxu0 0.0
    %997 = vmatpush1.msra.mxu0 0.0
    %998 = vmatprep.mubr.f32.mxu0 0.0
    %999 = vmatmul.mubr.f32.gmra.mrb[0].mxu0 %v932
    %v1000 = vpop.f32.mrb[0].mxu0
    %v1001 = vadd.f32 %v928, %v1000
    %v1002 = vpop.f32.mrb[0].mxu0
    %1003 = vdwg.mxu0
    %v1004 = vmax.f32 %v1001, 0.0
    %v1005 = vld [vmem:[%s8] sm:$0xff]
    %v1006 = vld [vmem:[%s8 + $0x8] sm:$0xff]
    %v1007 = vld [vmem:[%s8 + $0x10] sm:$0xff]
    %v1008 = vld [vmem:[%s8 + $0x18] sm:$0xff]
    %v1009 = vld [vmem:[%s8 + $0x20] sm:$0xff]
    %v1010 = vld [vmem:[%s8 + $0x28] sm:$0xff]
    %v1011 = vld [vmem:[%s8 + $0x30] sm:$0xff]
    %v1012 = vld [vmem:[%s8 + $0x38] sm:$0xff]
    %v1013 = vld [vmem:[%s9] sm:$0xff]
    %v1014 = vld [vmem:[%s9 + $0x8] sm:$0xff]
    %v1016 = vsel %vm930, %v1004, 0
    %1018 = vmatprep.subr.mxu0 0.0
    %1019 = vmatpush1.msra.mxu0 %v1013
    %1020 = vmatprep.subr.mxu0 0.0
    %1021 = vmatpush1.msra.mxu0 %v1014
    %1022 = vmatprep.subr.mxu0 0.0
    %1023 = vmatpush1.msra.mxu0 0.0
    %1024 = vmatprep.subr.mxu0 0.0
    %1025 = vmatpush1.msra.mxu0 0.0
    %1026 = vmatprep.subr.mxu0 0.0
    %1027 = vmatpush1.msra.mxu0 0.0
    %1028 = vmatprep.subr.mxu0 0.0
    %1029 = vmatpush1.msra.mxu0 0.0
    %1030 = vmatprep.subr.mxu0 0.0
    %1031 = vmatpush1.msra.mxu0 0.0
    %1032 = vmatprep.subr.mxu0 0.0
    %1033 = vmatpush1.msra.mxu0 0.0
    %1034 = vmatprep.subr.mxu0 0.0
    %1035 = vmatpush1.msra.mxu0 0.0
    %1036 = vmatprep.subr.mxu0 0.0
    %1037 = vmatpush1.msra.mxu0 0.0
    %1038 = vmatprep.subr.mxu0 0.0
    %1039 = vmatpush1.msra.mxu0 0.0
    %1040 = vmatprep.subr.mxu0 0.0
    %1041 = vmatpush1.msra.mxu0 0.0
    %1042 = vmatprep.subr.mxu0 0.0
    %1043 = vmatpush1.msra.mxu0 0.0
    %1044 = vmatprep.subr.mxu0 0.0
    %1045 = vmatpush1.msra.mxu0 0.0
    %1046 = vmatprep.subr.mxu0 0.0
    %1047 = vmatpush1.msra.mxu0 0.0
    %1048 = vmatprep.subr.mxu0 0.0
    %1049 = vmatpush1.msra.mxu0 0.0
    %1050 = vmatprep.subr.mxu0 0.0
    %1051 = vmatpush1.msra.mxu0 0.0
    %1052 = vmatprep.subr.mxu0 0.0
    %1053 = vmatpush1.msra.mxu0 0.0
    %1054 = vmatprep.subr.mxu0 0.0
    %1055 = vmatpush1.msra.mxu0 0.0
    %1056 = vmatprep.subr.mxu0 0.0
    %1057 = vmatpush1.msra.mxu0 0.0
    %1058 = vmatprep.subr.mxu0 0.0
    %1059 = vmatpush1.msra.mxu0 0.0
    %1060 = vmatprep.subr.mxu0 0.0
    %1061 = vmatpush1.msra.mxu0 0.0
    %1062 = vmatprep.subr.mxu0 0.0
    %1063 = vmatpush1.msra.mxu0 0.0
    %1064 = vmatprep.subr.mxu0 0.0
    %1065 = vmatpush1.msra.mxu0 0.0
    %1066 = vmatprep.subr.mxu0 0.0
    %1067 = vmatpush1.msra.mxu0 0.0
    %1068 = vmatprep.subr.mxu0 0.0
    %1069 = vmatpush1.msra.mxu0 0.0
    %1070 = vmatprep.subr.mxu0 0.0
    %1071 = vmatpush1.msra.mxu0 0.0
    %1072 = vmatprep.subr.mxu0 0.0
    %1073 = vmatpush1.msra.mxu0 0.0
    %1074 = vmatprep.subr.mxu0 0.0
    %1075 = vmatpush1.msra.mxu0 0.0
    %1076 = vmatprep.subr.mxu0 0.0
    %1077 = vmatpush1.msra.mxu0 0.0
    %1078 = vmatprep.subr.mxu0 0.0
    %1079 = vmatpush1.msra.mxu0 0.0
    %1080 = vmatprep.subr.mxu0 0.0
    %1081 = vmatpush1.msra.mxu0 0.0
    %1082 = vmatprep.mubr.f32.mxu0 0.0
    %1083 = vmatmul.mubr.f32.gmra.mrb[0].mxu0 %v1016
    %v1084 = vpop.f32.mrb[0].mxu0
    %v1085 = vadd.f32 0.0, %v1084
    %v1086 = vpop.f32.mrb[0].mxu0
    %1087 = vdwg.mxu0
    %vm1088 = vcmask 523264
    %v1090 = vsel %vm1088, %v795, 0
    %1092 = vmatprep.subr.mxu0 0.0
    %1093 = vmatpush1.msra.mxu0 %v1005
    %1094 = vmatprep.subr.mxu0 0.0
    %1095 = vmatpush1.msra.mxu0 %v1006
    %1096 = vmatprep.subr.mxu0 0.0
    %1097 = vmatpush1.msra.mxu0 %v1007
    %1098 = vmatprep.subr.mxu0 0.0
    %1099 = vmatpush1.msra.mxu0 %v1008
    %1100 = vmatprep.subr.mxu0 0.0
    %1101 = vmatpush1.msra.mxu0 %v1009
    %1102 = vmatprep.subr.mxu0 0.0
    %1103 = vmatpush1.msra.mxu0 %v1010
    %1104 = vmatprep.subr.mxu0 0.0
    %1105 = vmatpush1.msra.mxu0 %v1011
    %1106 = vmatprep.subr.mxu0 0.0
    %1107 = vmatpush1.msra.mxu0 %v1012
    %1108 = vmatprep.subr.mxu0 0.0
    %1109 = vmatpush1.msra.mxu0 0.0
    %1110 = vmatprep.subr.mxu0 0.0
    %1111 = vmatpush1.msra.mxu0 0.0
    %1112 = vmatprep.subr.mxu0 0.0
    %1113 = vmatpush1.msra.mxu0 0.0
    %1114 = vmatprep.subr.mxu0 0.0
    %1115 = vmatpush1.msra.mxu0 0.0
    %1116 = vmatprep.subr.mxu0 0.0
    %1117 = vmatpush1.msra.mxu0 0.0
    %1118 = vmatprep.subr.mxu0 0.0
    %1119 = vmatpush1.msra.mxu0 0.0
    %1120 = vmatprep.subr.mxu0 0.0
    %1121 = vmatpush1.msra.mxu0 0.0
    %1122 = vmatprep.subr.mxu0 0.0
    %1123 = vmatpush1.msra.mxu0 0.0
    %1124 = vmatprep.subr.mxu0 0.0
    %1125 = vmatpush1.msra.mxu0 0.0
    %1126 = vmatprep.subr.mxu0 0.0
    %1127 = vmatpush1.msra.mxu0 0.0
    %1128 = vmatprep.subr.mxu0 0.0
    %1129 = vmatpush1.msra.mxu0 0.0
    %1130 = vmatprep.subr.mxu0 0.0
    %1131 = vmatpush1.msra.mxu0 0.0
    %1132 = vmatprep.subr.mxu0 0.0
    %1133 = vmatpush1.msra.mxu0 0.0
    %1134 = vmatprep.subr.mxu0 0.0
    %1135 = vmatpush1.msra.mxu0 0.0
    %1136 = vmatprep.subr.mxu0 0.0
    %1137 = vmatpush1.msra.mxu0 0.0
    %1138 = vmatprep.subr.mxu0 0.0
    %1139 = vmatpush1.msra.mxu0 0.0
    %1140 = vmatprep.subr.mxu0 0.0
    %1141 = vmatpush1.msra.mxu0 0.0
    %1142 = vmatprep.subr.mxu0 0.0
    %1143 = vmatpush1.msra.mxu0 0.0
    %1144 = vmatprep.subr.mxu0 0.0
    %1145 = vmatpush1.msra.mxu0 0.0
    %1146 = vmatprep.subr.mxu0 0.0
    %1147 = vmatpush1.msra.mxu0 0.0
    %1148 = vmatprep.subr.mxu0 0.0
    %1149 = vmatpush1.msra.mxu0 0.0
    %1150 = vmatprep.subr.mxu0 0.0
    %1151 = vmatpush1.msra.mxu0 0.0
    %1152 = vmatprep.subr.mxu0 0.0
    %1153 = vmatpush1.msra.mxu0 0.0
    %1154 = vmatprep.subr.mxu0 0.0
    %1155 = vmatpush1.msra.mxu0 0.0
    %1156 = vmatprep.mubr.f32.mxu0 0.0
    %1157 = vmatmul.mubr.f32.gmra.mrb[0].mxu0 %v1090
    %v1158 = vpop.f32.mrb[0].mxu0
    %v1159 = vadd.f32 %v1085, %v1158
    %v1160 = vpop.f32.mrb[0].mxu0
    %1161 = vdwg.mxu0
    %v1162 = vld [vmem:[%s10] sm:$0x1]
    %v1164 = vlaneseq
    %v1165 = vshrl.u32 %v1164, 7
    %v1166 = vsub.s32 0, %v1165
    %v1167 = vrot.slane %v1162, %v1166
    %v1169 = vadd.f32 %v1159, %v1167
    %v1170 = vld [vmem:[%s11] sm:$0xff]
    %v1171 = vld [vmem:[%s12] sm:$0x1]
    %v1173 = vlaneseq
    %v1174 = vshrl.u32 %v1173, 7
    %v1175 = vsub.s32 0, %v1174
    %v1176 = vrot.slane %v1171, %v1175
    %v1178 = vmul.f32 %v800, %v1176
    %vm1179 = vcmask 64512
    %v1181 = vsel %vm1179, %v1169, 0
    %1183 = vmatprep.subr.mxu0 0.0
    %1184 = vmatpush1.msra.mxu0 %v1170
    %1185 = vmatprep.subr.mxu0 0.0
    %1186 = vmatpush1.msra.mxu0 0.0
    %1187 = vmatprep.subr.mxu0 0.0
    %1188 = vmatpush1.msra.mxu0 0.0
    %1189 = vmatprep.subr.mxu0 0.0
    %1190 = vmatpush1.msra.mxu0 0.0
    %1191 = vmatprep.subr.mxu0 0.0
    %1192 = vmatpush1.msra.mxu0 0.0
    %1193 = vmatprep.subr.mxu0 0.0
    %1194 = vmatpush1.msra.mxu0 0.0
    %1195 = vmatprep.subr.mxu0 0.0
    %1196 = vmatpush1.msra.mxu0 0.0
    %1197 = vmatprep.subr.mxu0 0.0
    %1198 = vmatpush1.msra.mxu0 0.0
    %1199 = vmatprep.subr.mxu0 0.0
    %1200 = vmatpush1.msra.mxu0 0.0
    %1201 = vmatprep.subr.mxu0 0.0
    %1202 = vmatpush1.msra.mxu0 0.0
    %1203 = vmatprep.subr.mxu0 0.0
    %1204 = vmatpush1.msra.mxu0 0.0
    %1205 = vmatprep.subr.mxu0 0.0
    %1206 = vmatpush1.msra.mxu0 0.0
    %1207 = vmatprep.subr.mxu0 0.0
    %1208 = vmatpush1.msra.mxu0 0.0
    %1209 = vmatprep.subr.mxu0 0.0
    %1210 = vmatpush1.msra.mxu0 0.0
    %1211 = vmatprep.subr.mxu0 0.0
    %1212 = vmatpush1.msra.mxu0 0.0
    %1213 = vmatprep.subr.mxu0 0.0
    %1214 = vmatpush1.msra.mxu0 0.0
    %1215 = vmatprep.subr.mxu0 0.0
    %1216 = vmatpush1.msra.mxu0 0.0
    %1217 = vmatprep.subr.mxu0 0.0
    %1218 = vmatpush1.msra.mxu0 0.0
    %1219 = vmatprep.subr.mxu0 0.0
    %1220 = vmatpush1.msra.mxu0 0.0
    %1221 = vmatprep.subr.mxu0 0.0
    %1222 = vmatpush1.msra.mxu0 0.0
    %1223 = vmatprep.subr.mxu0 0.0
    %1224 = vmatpush1.msra.mxu0 0.0
    %1225 = vmatprep.subr.mxu0 0.0
    %1226 = vmatpush1.msra.mxu0 0.0
    %1227 = vmatprep.subr.mxu0 0.0
    %1228 = vmatpush1.msra.mxu0 0.0
    %1229 = vmatprep.subr.mxu0 0.0
    %1230 = vmatpush1.msra.mxu0 0.0
    %1231 = vmatprep.subr.mxu0 0.0
    %1232 = vmatpush1.msra.mxu0 0.0
    %1233 = vmatprep.subr.mxu0 0.0
    %1234 = vmatpush1.msra.mxu0 0.0
    %1235 = vmatprep.subr.mxu0 0.0
    %1236 = vmatpush1.msra.mxu0 0.0
    %1237 = vmatprep.subr.mxu0 0.0
    %1238 = vmatpush1.msra.mxu0 0.0
    %1239 = vmatprep.subr.mxu0 0.0
    %1240 = vmatpush1.msra.mxu0 0.0
    %1241 = vmatprep.subr.mxu0 0.0
    %1242 = vmatpush1.msra.mxu0 0.0
    %1243 = vmatprep.subr.mxu0 0.0
    %1244 = vmatpush1.msra.mxu0 0.0
    %1245 = vmatprep.subr.mxu0 0.0
    %1246 = vmatpush1.msra.mxu0 0.0
    %1247 = vmatprep.mubr.f32.mxu0 0.0
    %1248 = vmatmul.mubr.f32.gmra.mrb[0].mxu0 %v1181
    %v1249 = vpop.f32.mrb[0].mxu0
    %v1250 = vadd.f32 %v1178, %v1249
    %v1251 = vpop.f32.mrb[0].mxu0
    %1252 = vdwg.mxu0
    %v1253 = vld [vmem:[%s13] sm:$0x1]
    %v1255 = vlaneseq
    %v1256 = vshrl.u32 %v1255, 7
    %v1257 = vsub.s32 0, %v1256
    %v1258 = vrot.slane %v1253, %v1257
    %v1260 = vadd.f32 %v1250, %v1258
    %v1261 = vmax.f32 %v1260, 0.0
    %v1262 = vld [vmem:[%s14] sm:$0xff]
    %v1263 = vld [vmem:[%s14 + $0x8] sm:$0xff]
    %v1264 = vld [vmem:[%s14 + $0x10] sm:$0xff]
    %v1265 = vld [vmem:[%s14 + $0x18] sm:$0xff]
    %v1266 = vld [vmem:[%s15] sm:$0x1]
    %v1268 = vlaneseq
    %v1269 = vshrl.u32 %v1268, 7
    %v1270 = vsub.s32 0, %v1269
    %v1271 = vrot.slane %v1266, %v1270
    %vm1273 = vcmask 261120
    %v1275 = vsel %vm1273, %v1261, 0
    %1277 = vmatprep.subr.mxu0 0.0
    %1278 = vmatpush1.msra.mxu0 %v1262
    %1279 = vmatprep.subr.mxu0 0.0
    %1280 = vmatpush1.msra.mxu0 %v1263
    %1281 = vmatprep.subr.mxu0 0.0
    %1282 = vmatpush1.msra.mxu0 %v1264
    %1283 = vmatprep.subr.mxu0 0.0
    %1284 = vmatpush1.msra.mxu0 %v1265
    %1285 = vmatprep.subr.mxu0 0.0
    %1286 = vmatpush1.msra.mxu0 0.0
    %1287 = vmatprep.subr.mxu0 0.0
    %1288 = vmatpush1.msra.mxu0 0.0
    %1289 = vmatprep.subr.mxu0 0.0
    %1290 = vmatpush1.msra.mxu0 0.0
    %1291 = vmatprep.subr.mxu0 0.0
    %1292 = vmatpush1.msra.mxu0 0.0
    %1293 = vmatprep.subr.mxu0 0.0
    %1294 = vmatpush1.msra.mxu0 0.0
    %1295 = vmatprep.subr.mxu0 0.0
    %1296 = vmatpush1.msra.mxu0 0.0
    %1297 = vmatprep.subr.mxu0 0.0
    %1298 = vmatpush1.msra.mxu0 0.0
    %1299 = vmatprep.subr.mxu0 0.0
    %1300 = vmatpush1.msra.mxu0 0.0
    %1301 = vmatprep.subr.mxu0 0.0
    %1302 = vmatpush1.msra.mxu0 0.0
    %1303 = vmatprep.subr.mxu0 0.0
    %1304 = vmatpush1.msra.mxu0 0.0
    %1305 = vmatprep.subr.mxu0 0.0
    %1306 = vmatpush1.msra.mxu0 0.0
    %1307 = vmatprep.subr.mxu0 0.0
    %1308 = vmatpush1.msra.mxu0 0.0
    %1309 = vmatprep.subr.mxu0 0.0
    %1310 = vmatpush1.msra.mxu0 0.0
    %1311 = vmatprep.subr.mxu0 0.0
    %1312 = vmatpush1.msra.mxu0 0.0
    %1313 = vmatprep.subr.mxu0 0.0
    %1314 = vmatpush1.msra.mxu0 0.0
    %1315 = vmatprep.subr.mxu0 0.0
    %1316 = vmatpush1.msra.mxu0 0.0
    %1317 = vmatprep.subr.mxu0 0.0
    %1318 = vmatpush1.msra.mxu0 0.0
    %1319 = vmatprep.subr.mxu0 0.0
    %1320 = vmatpush1.msra.mxu0 0.0
    %1321 = vmatprep.subr.mxu0 0.0
    %1322 = vmatpush1.msra.mxu0 0.0
    %1323 = vmatprep.subr.mxu0 0.0
    %1324 = vmatpush1.msra.mxu0 0.0
    %1325 = vmatprep.subr.mxu0 0.0
    %1326 = vmatpush1.msra.mxu0 0.0
    %1327 = vmatprep.subr.mxu0 0.0
    %1328 = vmatpush1.msra.mxu0 0.0
    %1329 = vmatprep.subr.mxu0 0.0
    %1330 = vmatpush1.msra.mxu0 0.0
    %1331 = vmatprep.subr.mxu0 0.0
    %1332 = vmatpush1.msra.mxu0 0.0
    %1333 = vmatprep.subr.mxu0 0.0
    %1334 = vmatpush1.msra.mxu0 0.0
    %1335 = vmatprep.subr.mxu0 0.0
    %1336 = vmatpush1.msra.mxu0 0.0
    %1337 = vmatprep.subr.mxu0 0.0
    %1338 = vmatpush1.msra.mxu0 0.0
    %1339 = vmatprep.subr.mxu0 0.0
    %1340 = vmatpush1.msra.mxu0 0.0
    %1341 = vmatprep.mubr.f32.mxu0 0.0
    %1342 = vmatmul.mubr.f32.gmra.mrb[0].mxu0 %v1275
    %v1343 = vpop.f32.mrb[0].mxu0
    %v1344 = vadd.f32 %v1271, %v1343
    %v1345 = vpop.f32.mrb[0].mxu0
    %1346 = vdwg.mxu0
    %v1347 = vmax.f32 %v1344, 0.0
    %v1348 = vld [vmem:[%s16] sm:$0xff]
    %v1349 = vld [vmem:[%s16 + $0x8] sm:$0xff]
    %v1350 = vld [vmem:[%s16 + $0x10] sm:$0xff]
    %v1351 = vld [vmem:[%s16 + $0x18] sm:$0xff]
    %v1352 = vld [vmem:[%s17] sm:$0x1]
    %v1354 = vlaneseq
    %v1355 = vshrl.u32 %v1354, 7
    %v1356 = vsub.s32 0, %v1355
    %v1357 = vrot.slane %v1352, %v1356
    %v1360 = vsel %vm1273, %v1347, 0
    %1362 = vmatprep.subr.mxu0 0.0
    %1363 = vmatpush1.msra.mxu0 %v1348
    %1364 = vmatprep.subr.mxu0 0.0
    %1365 = vmatpush1.msra.mxu0 %v1349
    %1366 = vmatprep.subr.mxu0 0.0
    %1367 = vmatpush1.msra.mxu0 %v1350
    %1368 = vmatprep.subr.mxu0 0.0
    %1369 = vmatpush1.msra.mxu0 %v1351
    %1370 = vmatprep.subr.mxu0 0.0
    %1371 = vmatpush1.msra.mxu0 0.0
    %1372 = vmatprep.subr.mxu0 0.0
    %1373 = vmatpush1.msra.mxu0 0.0
    %1374 = vmatprep.subr.mxu0 0.0
    %1375 = vmatpush1.msra.mxu0 0.0
    %1376 = vmatprep.subr.mxu0 0.0
    %1377 = vmatpush1.msra.mxu0 0.0
    %1378 = vmatprep.subr.mxu0 0.0
    %1379 = vmatpush1.msra.mxu0 0.0
    %1380 = vmatprep.subr.mxu0 0.0
    %1381 = vmatpush1.msra.mxu0 0.0
    %1382 = vmatprep.subr.mxu0 0.0
    %1383 = vmatpush1.msra.mxu0 0.0
    %1384 = vmatprep.subr.mxu0 0.0
    %1385 = vmatpush1.msra.mxu0 0.0
    %1386 = vmatprep.subr.mxu0 0.0
    %1387 = vmatpush1.msra.mxu0 0.0
    %1388 = vmatprep.subr.mxu0 0.0
    %1389 = vmatpush1.msra.mxu0 0.0
    %1390 = vmatprep.subr.mxu0 0.0
    %1391 = vmatpush1.msra.mxu0 0.0
    %1392 = vmatprep.subr.mxu0 0.0
    %1393 = vmatpush1.msra.mxu0 0.0
    %1394 = vmatprep.subr.mxu0 0.0
    %1395 = vmatpush1.msra.mxu0 0.0
    %1396 = vmatprep.subr.mxu0 0.0
    %1397 = vmatpush1.msra.mxu0 0.0
    %1398 = vmatprep.subr.mxu0 0.0
    %1399 = vmatpush1.msra.mxu0 0.0
    %1400 = vmatprep.subr.mxu0 0.0
    %1401 = vmatpush1.msra.mxu0 0.0
    %1402 = vmatprep.subr.mxu0 0.0
    %1403 = vmatpush1.msra.mxu0 0.0
    %1404 = vmatprep.subr.mxu0 0.0
    %1405 = vmatpush1.msra.mxu0 0.0
    %1406 = vmatprep.subr.mxu0 0.0
    %1407 = vmatpush1.msra.mxu0 0.0
    %1408 = vmatprep.subr.mxu0 0.0
    %1409 = vmatpush1.msra.mxu0 0.0
    %1410 = vmatprep.subr.mxu0 0.0
    %1411 = vmatpush1.msra.mxu0 0.0
    %1412 = vmatprep.subr.mxu0 0.0
    %1413 = vmatpush1.msra.mxu0 0.0
    %1414 = vmatprep.subr.mxu0 0.0
    %1415 = vmatpush1.msra.mxu0 0.0
    %1416 = vmatprep.subr.mxu0 0.0
    %1417 = vmatpush1.msra.mxu0 0.0
    %1418 = vmatprep.subr.mxu0 0.0
    %1419 = vmatpush1.msra.mxu0 0.0
    %1420 = vmatprep.subr.mxu0 0.0
    %1421 = vmatpush1.msra.mxu0 0.0
    %1422 = vmatprep.subr.mxu0 0.0
    %1423 = vmatpush1.msra.mxu0 0.0
    %1424 = vmatprep.subr.mxu0 0.0
    %1425 = vmatpush1.msra.mxu0 0.0
    %1426 = vmatprep.mubr.f32.mxu0 0.0
    %1427 = vmatmul.mubr.f32.gmra.mrb[0].mxu0 %v1360
    %v1428 = vpop.f32.mrb[0].mxu0
    %v1429 = vadd.f32 %v1357, %v1428
    %v1430 = vpop.f32.mrb[0].mxu0
    %1431 = vdwg.mxu0
    %vm1432 = vcmask 58368
    %1433 = vst.msk [vmem:[#allocation2] sm:$0x3] %vm1432, %v1429
    // Predicated region
    $region74: #{ldm_forward.1} parent=1 // pred_check
      _
    $region75: #{ldm_forward.1} parent=1 // pred_check_branch
      %1435 = sbr.rel (0) target = $region77
    $region76: #{ldm_forward.1} parent=1 // pred_region
      %s1437 = ssub.s32 32, 32
      %1438 = vsyncadd [#allocation3], %s1437
      %s1440 = sshll.u32 [#allocation2], 4
      %s1441 = int_to_ptr.vmem [resolvable:$true] %s1440
      %1443 = dma.vmem_to_hbm [thread:$0]  %s1441, 32, %s18, [#allocation3]
    $region77: #{ldm_forward.1} parent=1 // pred_fallthru
      _
    // Predicated region
    $region78: #{ldm_forward.1} parent=1 // pred_check
      _
    $region79: #{ldm_forward.1} parent=1 // pred_check_branch
      %1445 = sbr.rel (0) target = $region81
    $region80: #{ldm_forward.1} parent=1 // pred_region
      %1446 = dma.done [#allocation3], 32
    $region81: #{ldm_forward.1} parent=1 // pred_fallthru
      _
    %1447 = vsyncpa [#allocation3], 1

</llo_original>
